<compile_context>
chip_gen: v7x
topology: tpu7x:2x2x1
jax: 0.10.0
libtpu: 0.0.40
codegen_flags: <defaults>
</compile_context>

<pallas_src>
import jax
import jax.numpy as jnp
from jax.experimental import pallas as pl
from jax.experimental.pallas import tpu as pltpu

LANES = 128  # pad node dim and feature dims to multiples of the lane width


def _round_up(n, m):
    return ((n + m - 1) // m) * m


def _vmem_limit_bytes():
    """Per-generation scoped-VMEM budget: ~7/8 of physical VMEM."""
    try:
        cap = int(pltpu.get_tpu_info().vmem_capacity_bytes)
    except Exception:
        cap = 64 * 1024 * 1024  # conservative fallback (v7x physical VMEM)
    return (cap * 7) // 8


# ----------------------------- Pallas kernel -------------------------------
def fused_mpn_kernel(a_ref, x_ref, w_ref, b_ref, o_ref):
    """All GraphConv layers, statically unrolled, A resident in VMEM.

    a_ref : (Np, Np)        bf16  dense message-passing matrix A[dst, src]
    x_ref : (Np, Fp)        bf16  initial node features (zero padded)
    w_ref : (L, 2*Fp, Fp)   bf16  per-layer stacked [W_rel ; W_root]
    b_ref : (L, 1, Fp)      f32   per-layer bias (lin_rel bias)
    o_ref : (Np, Fp)        f32   final layer output (no relu)
    """
    n_layers = w_ref.shape[0]
    fp = x_ref.shape[1]

    a = a_ref[...]          # bf16, loaded once, resident for all layers
    h = x_ref[...]          # bf16 activations, carried in vregs

    out = None
    for layer in range(n_layers):
        # Neighbor sum-aggregation: agg[i, :] = sum_j A[i, j] * h[j, :]
        # bf16 x bf16 -> f32 accumulate: native 1-pass MXU mode.
        agg = jnp.dot(a, h, preferred_element_type=jnp.float32)

        # GraphConv: agg @ W_rel + h @ W_root + b.  Two accumulating matmuls
        # on static slices of the stacked weight ref (no concat temporary).
        out = (
            jnp.dot(agg.astype(jnp.bfloat16), w_ref[layer, :fp, :],
                    preferred_element_type=jnp.float32)
            + jnp.dot(h, w_ref[layer, fp:, :],
                      preferred_element_type=jnp.float32)
            + b_ref[layer]
        )

        # ReLU on every layer except the last (static Python control flow —
        # no per-element select, no pl.when predicate).
        if layer < n_layers - 1:
            h = jnp.maximum(out, 0.0).astype(jnp.bfloat16)

    o_ref[...] = out  # f32 result of the last layer


def fused_mpn(a_bf16, x_pad, w_stack, b_stack):
    """Single gridless pallas_call: every operand resident in VMEM once."""
    np_, fp = x_pad.shape
    vmem = pltpu.MemorySpace.VMEM

    # Resident-footprint sanity check (dominant operand is A).
    resident_bytes = (a_bf16.size * 2 + x_pad.size * 2 + w_stack.size * 2
                      + b_stack.size * 4 + np_ * fp * 4)
    budget = _vmem_limit_bytes()
    assert resident_bytes * 2 < budget, (
        "graph too large for the resident-A fused kernel; use the tiled "
        "(dst, src) / CSR scaling path (see TODO at top of file)")

    return pl.pallas_call(
        fused_mpn_kernel,
        out_shape=jax.ShapeDtypeStruct((np_, fp), jnp.float32),
        in_specs=[
            pl.BlockSpec(memory_space=vmem),   # A   (whole array, one copy)
            pl.BlockSpec(memory_space=vmem),   # X
            pl.BlockSpec(memory_space=vmem),   # stacked weights
            pl.BlockSpec(memory_space=vmem),   # stacked biases
        ],
        out_specs=pl.BlockSpec(memory_space=vmem),
        compiler_params=pltpu.CompilerParams(vmem_limit_bytes=budget),
    )(a_bf16, x_pad, w_stack, b_stack)


# ------------------------------- glue (JAX) --------------------------------
def build_adjacency(edge_index, num_nodes_padded):
    """Dense message-passing matrix A[dst, src] = edge multiplicity (bf16).

    bf16 is exact for integer multiplicities <= 256.  Padded rows/columns are
    zero, so padded nodes never contribute to real nodes' aggregation.
    """
    src = edge_index[0]
    dst = edge_index[1]
    a = jnp.zeros((num_nodes_padded, num_nodes_padded), jnp.float32)
    a = a.at[dst, src].add(1.0)
    return a.astype(jnp.bfloat16)


def pack_params(params, fp):
    """Zero-pad & stack per-layer (W_rel, W_root, b) into MXU-friendly slabs.

    Returns W: (L, 2*fp, fp) bf16 with [W_rel ; W_root] stacked on the rows,
            B: (L, 1, fp)   f32.
    Zero padding keeps the padded feature lanes exactly zero through all
    layers.
    """
    w_list, b_list = [], []
    for w_rel, w_root, b in params:
        f_in, f_out = w_rel.shape
        w = jnp.zeros((2 * fp, fp), jnp.float32)
        w = w.at[:f_in, :f_out].set(w_rel)
        w = w.at[fp:fp + f_in, :f_out].set(w_root)
        bb = jnp.zeros((1, fp), jnp.float32).at[0, :f_out].set(b)
        w_list.append(w)
        b_list.append(bb)
    return jnp.stack(w_list).astype(jnp.bfloat16), jnp.stack(b_list)


def mpn_forward(x, edge_index, params):
    n, f_in = x.shape
    f_out_final = params[-1][0].shape[1]
    max_feat = max([f_in] + [w.shape[1] for (w, _, _) in params])
    fp = _round_up(max_feat, LANES)   # lane-dense feature width
    np_ = _round_up(n, LANES)         # lane-dense node dim (A's lane / MXU K)

    x_pad = (jnp.zeros((np_, fp), jnp.float32).at[:n, :f_in].set(x)
             .astype(jnp.bfloat16))
    a = build_adjacency(edge_index, np_)
    w_stack, b_stack = pack_params(params, fp)

    out_pad = fused_mpn(a, x_pad, w_stack, b_stack)
    return out_pad[:n, :f_out_final]


def mpn_reference(x, edge_index, params, *, match_kernel_precision=True):
    """Pure-JAX dense reference.

    With match_kernel_precision=True it applies the same bf16 rounding points
    as the kernel (bf16 operands, f32 accumulation), so any mismatch is an
    implementation bug rather than bf16 rounding noise.
    """
    n = x.shape[0]
    a = jnp.zeros((n, n), jnp.float32).at[edge_index[1], edge_index[0]].add(1.0)
    if match_kernel_precision:
        a = a.astype(jnp.bfloat16)
        h = x.astype(jnp.bfloat16)
        out = None
        for i, (w_rel, w_root, b) in enumerate(params):
            agg = jnp.dot(a, h, preferred_element_type=jnp.float32)
            out = (jnp.dot(agg.astype(jnp.bfloat16), w_rel.astype(jnp.bfloat16),
                           preferred_element_type=jnp.float32)
                   + jnp.dot(h, w_root.astype(jnp.bfloat16),
                             preferred_element_type=jnp.float32)
                   + b)
            if i < len(params) - 1:
                h = jnp.maximum(out, 0.0).astype(jnp.bfloat16)
        return out
    hi = jax.lax.Precision.HIGHEST
    h = x
    out = None
    for i, (w_rel, w_root, b) in enumerate(params):
        agg = jnp.dot(a, h, precision=hi)
        out = (jnp.dot(agg, w_rel, precision=hi) + b
               + jnp.dot(h, w_root, precision=hi))
        if i < len(params) - 1:
            h = jnp.maximum(out, 0.0)
    return out


def init_params(key, in_channels, hidden_channels, output_channels,
                num_conv_layers=3):
    """Deterministic synthetic weights for each GraphConv layer."""
    dims = ([in_channels] + [hidden_channels] * (num_conv_layers - 1)
            + [output_channels])
    params = []
    for i in range(num_conv_layers):
        f_in, f_out = dims[i], dims[i + 1]
        key, k1, k2, k3 = jax.random.split(key, 4)
        scale = 1.0 / jnp.sqrt(jnp.float32(f_in))
        w_rel = jax.random.uniform(k1, (f_in, f_out), jnp.float32,
                                   -scale, scale)
        w_root = jax.random.uniform(k2, (f_in, f_out), jnp.float32,
                                    -scale, scale)
        b = jax.random.uniform(k3, (f_out,), jnp.float32, -scale, scale)
        params.append((w_rel, w_root, b))
    return params


# --------------------------------- main -------------------------------------
if __name__ == "__main__":
    key = jax.random.PRNGKey(0)
    k_x, k_e, k_p = jax.random.split(key, 3)

    num_nodes = 8
    in_channels = 4
    hidden_channels = 32
    output_channels = 8
    num_edges = 16

    # node features and a random directed edge list (row 0 = src, row 1 = dst)
    x = jax.random.normal(k_x, (num_nodes, in_channels), jnp.float32)
    edge_index = jax.random.randint(k_e, (2, num_edges), 0, num_nodes,
                                    dtype=jnp.int32)

    params = init_params(k_p, in_channels, hidden_channels, output_channels,
                         num_conv_layers=3)

    out = mpn_forward(x, edge_index, params)
    jax.block_until_ready(out)
    assert out.shape == (num_nodes, output_channels)

    # Correctness: compare against a precision-matched pure-JAX reference.
    ref = mpn_reference(x, edge_index, params, match_kernel_precision=True)
    err = jnp.max(jnp.abs(out - ref))
    assert jnp.allclose(out, ref, rtol=2e-3, atol=2e-3), (
        f"max abs err vs matched reference = {err}")

    print("KERNEL_OK")
</pallas_src>

<mosaic_0001>
module attributes {stable_mosaic.version = 11 : i64} {
  func.func @fused_mpn_kernel(%arg0: memref<128x128xbf16, #tpu.memory_space<vmem>>, %arg1: memref<128x128xbf16, #tpu.memory_space<vmem>>, %arg2: memref<3x256x128xbf16, #tpu.memory_space<vmem>>, %arg3: memref<3x1x128xf32, #tpu.memory_space<vmem>>, %arg4: memref<128x128xf32, #tpu.memory_space<vmem>>) attributes {dimension_semantics = [], scalar_prefetch = 0 : i64, scratch_operands = 0 : i64, tpu.core_type = #tpu.core_type<tc>} {
    %c0 = arith.constant 0 : index
    %c0_0 = arith.constant 0 : index
    %0 = vector.load %arg0[%c0, %c0_0] : memref<128x128xbf16, #tpu.memory_space<vmem>>, vector<128x128xbf16>
    %c0_1 = arith.constant 0 : index
    %c0_2 = arith.constant 0 : index
    %1 = vector.load %arg1[%c0_1, %c0_2] : memref<128x128xbf16, #tpu.memory_space<vmem>>, vector<128x128xbf16>
    %cst = arith.constant dense<0.000000e+00> : vector<128x128xf32>
    %2 = tpu.matmul %0, %1, %cst {dimension_numbers = #tpu.dot_dimension_numbers<[1], [0], [0], [1], [0, 0, 1, 1], [], []>} : vector<128x128xbf16>, vector<128x128xbf16>, vector<128x128xf32> -> vector<128x128xf32>
    %3 = arith.truncf %2 : vector<128x128xf32> to vector<128x128xbf16>
    %c0_3 = arith.constant 0 : index
    %c0_4 = arith.constant 0 : index
    %c0_5 = arith.constant 0 : index
    %4 = vector.load %arg2[%c0_3, %c0_4, %c0_5] : memref<3x256x128xbf16, #tpu.memory_space<vmem>>, vector<1x128x128xbf16>
    %5 = vector.shape_cast %4 : vector<1x128x128xbf16> to vector<128x128xbf16>
    %cst_6 = arith.constant dense<0.000000e+00> : vector<128x128xf32>
    %6 = tpu.matmul %3, %5, %cst_6 {dimension_numbers = #tpu.dot_dimension_numbers<[1], [0], [0], [1], [0, 0, 1, 1], [], []>} : vector<128x128xbf16>, vector<128x128xbf16>, vector<128x128xf32> -> vector<128x128xf32>
    %c0_7 = arith.constant 0 : index
    %c128 = arith.constant 128 : index
    %c0_8 = arith.constant 0 : index
    %7 = vector.load %arg2[%c0_7, %c128, %c0_8] : memref<3x256x128xbf16, #tpu.memory_space<vmem>>, vector<1x128x128xbf16>
    %8 = vector.shape_cast %7 : vector<1x128x128xbf16> to vector<128x128xbf16>
    %cst_9 = arith.constant dense<0.000000e+00> : vector<128x128xf32>
    %9 = tpu.matmul %1, %8, %cst_9 {dimension_numbers = #tpu.dot_dimension_numbers<[1], [0], [0], [1], [0, 0, 1, 1], [], []>} : vector<128x128xbf16>, vector<128x128xbf16>, vector<128x128xf32> -> vector<128x128xf32>
    %10 = arith.addf %6, %9 : vector<128x128xf32>
    %c0_10 = arith.constant 0 : index
    %c0_11 = arith.constant 0 : index
    %c0_12 = arith.constant 0 : index
    %11 = vector.load %arg3[%c0_10, %c0_11, %c0_12] : memref<3x1x128xf32, #tpu.memory_space<vmem>>, vector<1x1x128xf32>
    %12 = vector.shape_cast %11 : vector<1x1x128xf32> to vector<1x128xf32>
    %13 = vector.broadcast %12 : vector<1x128xf32> to vector<128x128xf32>
    %14 = arith.addf %10, %13 : vector<128x128xf32>
    %cst_13 = arith.constant 0.000000e+00 : f32
    %15 = vector.broadcast %cst_13 : f32 to vector<128x128xf32>
    %16 = arith.maximumf %14, %15 : vector<128x128xf32>
    %17 = arith.truncf %16 : vector<128x128xf32> to vector<128x128xbf16>
    %cst_14 = arith.constant dense<0.000000e+00> : vector<128x128xf32>
    %18 = tpu.matmul %0, %17, %cst_14 {dimension_numbers = #tpu.dot_dimension_numbers<[1], [0], [0], [1], [0, 0, 1, 1], [], []>} : vector<128x128xbf16>, vector<128x128xbf16>, vector<128x128xf32> -> vector<128x128xf32>
    %19 = arith.truncf %18 : vector<128x128xf32> to vector<128x128xbf16>
    %c1 = arith.constant 1 : index
    %c0_15 = arith.constant 0 : index
    %c0_16 = arith.constant 0 : index
    %20 = vector.load %arg2[%c1, %c0_15, %c0_16] : memref<3x256x128xbf16, #tpu.memory_space<vmem>>, vector<1x128x128xbf16>
    %21 = vector.shape_cast %20 : vector<1x128x128xbf16> to vector<128x128xbf16>
    %cst_17 = arith.constant dense<0.000000e+00> : vector<128x128xf32>
    %22 = tpu.matmul %19, %21, %cst_17 {dimension_numbers = #tpu.dot_dimension_numbers<[1], [0], [0], [1], [0, 0, 1, 1], [], []>} : vector<128x128xbf16>, vector<128x128xbf16>, vector<128x128xf32> -> vector<128x128xf32>
    %c1_18 = arith.constant 1 : index
    %c128_19 = arith.constant 128 : index
    %c0_20 = arith.constant 0 : index
    %23 = vector.load %arg2[%c1_18, %c128_19, %c0_20] : memref<3x256x128xbf16, #tpu.memory_space<vmem>>, vector<1x128x128xbf16>
    %24 = vector.shape_cast %23 : vector<1x128x128xbf16> to vector<128x128xbf16>
    %cst_21 = arith.constant dense<0.000000e+00> : vector<128x128xf32>
    %25 = tpu.matmul %17, %24, %cst_21 {dimension_numbers = #tpu.dot_dimension_numbers<[1], [0], [0], [1], [0, 0, 1, 1], [], []>} : vector<128x128xbf16>, vector<128x128xbf16>, vector<128x128xf32> -> vector<128x128xf32>
    %26 = arith.addf %22, %25 : vector<128x128xf32>
    %c1_22 = arith.constant 1 : index
    %c0_23 = arith.constant 0 : index
    %c0_24 = arith.constant 0 : index
    %27 = vector.load %arg3[%c1_22, %c0_23, %c0_24] : memref<3x1x128xf32, #tpu.memory_space<vmem>>, vector<1x1x128xf32>
    %28 = vector.shape_cast %27 : vector<1x1x128xf32> to vector<1x128xf32>
    %29 = vector.broadcast %28 : vector<1x128xf32> to vector<128x128xf32>
    %30 = arith.addf %26, %29 : vector<128x128xf32>
    %cst_25 = arith.constant 0.000000e+00 : f32
    %31 = vector.broadcast %cst_25 : f32 to vector<128x128xf32>
    %32 = arith.maximumf %30, %31 : vector<128x128xf32>
    %33 = arith.truncf %32 : vector<128x128xf32> to vector<128x128xbf16>
    %cst_26 = arith.constant dense<0.000000e+00> : vector<128x128xf32>
    %34 = tpu.matmul %0, %33, %cst_26 {dimension_numbers = #tpu.dot_dimension_numbers<[1], [0], [0], [1], [0, 0, 1, 1], [], []>} : vector<128x128xbf16>, vector<128x128xbf16>, vector<128x128xf32> -> vector<128x128xf32>
    %35 = arith.truncf %34 : vector<128x128xf32> to vector<128x128xbf16>
    %c2 = arith.constant 2 : index
    %c0_27 = arith.constant 0 : index
    %c0_28 = arith.constant 0 : index
    %36 = vector.load %arg2[%c2, %c0_27, %c0_28] : memref<3x256x128xbf16, #tpu.memory_space<vmem>>, vector<1x128x128xbf16>
    %37 = vector.shape_cast %36 : vector<1x128x128xbf16> to vector<128x128xbf16>
    %cst_29 = arith.constant dense<0.000000e+00> : vector<128x128xf32>
    %38 = tpu.matmul %35, %37, %cst_29 {dimension_numbers = #tpu.dot_dimension_numbers<[1], [0], [0], [1], [0, 0, 1, 1], [], []>} : vector<128x128xbf16>, vector<128x128xbf16>, vector<128x128xf32> -> vector<128x128xf32>
    %c2_30 = arith.constant 2 : index
    %c128_31 = arith.constant 128 : index
    %c0_32 = arith.constant 0 : index
    %39 = vector.load %arg2[%c2_30, %c128_31, %c0_32] : memref<3x256x128xbf16, #tpu.memory_space<vmem>>, vector<1x128x128xbf16>
    %40 = vector.shape_cast %39 : vector<1x128x128xbf16> to vector<128x128xbf16>
    %cst_33 = arith.constant dense<0.000000e+00> : vector<128x128xf32>
    %41 = tpu.matmul %33, %40, %cst_33 {dimension_numbers = #tpu.dot_dimension_numbers<[1], [0], [0], [1], [0, 0, 1, 1], [], []>} : vector<128x128xbf16>, vector<128x128xbf16>, vector<128x128xf32> -> vector<128x128xf32>
    %42 = arith.addf %38, %41 : vector<128x128xf32>
    %c2_34 = arith.constant 2 : index
    %c0_35 = arith.constant 0 : index
    %c0_36 = arith.constant 0 : index
    %43 = vector.load %arg3[%c2_34, %c0_35, %c0_36] : memref<3x1x128xf32, #tpu.memory_space<vmem>>, vector<1x1x128xf32>
    %44 = vector.shape_cast %43 : vector<1x1x128xf32> to vector<1x128xf32>
    %45 = vector.broadcast %44 : vector<1x128xf32> to vector<128x128xf32>
    %46 = arith.addf %42, %45 : vector<128x128xf32>
    %c0_37 = arith.constant 0 : index
    %c0_38 = arith.constant 0 : index
    %47 = vector.load %arg4[%c0_37, %c0_38] : memref<128x128xf32, #tpu.memory_space<vmem>>, vector<128x128xf32>
    tpu.vector_store %arg4[%c0_37, %c0_38], %46 {strides = array<i32>} : memref<128x128xf32, #tpu.memory_space<vmem>>, vector<128x128xf32>,
    return
  }
}

</mosaic_0001>

<llo_original>
// kernel: tpu_custom_call.1
$region0: #{tpu_custom_call.1}
  #allocation0 [shape = 'u32[]', space=smem, size = 0x4, offset = 0x4, fixed_abs, tag = 'smem constant byte address 0x4 - core index']
  #allocation1 [shape = 'u32[144,128]{1,0:T(1,128)}', space=vmem, size = 0x12000, scoped, tag = 'internal scratch']
  %s0 = inlined_call_operand.hbm [shape: bf16[128,128], index: 0, kind: input, shape index: {}]
  %s1 = inlined_call_operand.hbm [shape: bf16[128,128], index: 1, kind: input, shape index: {}]
  %s2 = inlined_call_operand.hbm [shape: bf16[3,256,128], index: 2, kind: input, shape index: {}]
  %s3 = inlined_call_operand.vmem [shape: f32[3,1,128], index: 3, kind: input, shape index: {}]
  %s4 = inlined_call_operand.hbm [shape: f32[128,128], index: 4, kind: output, shape index: {}]
  %s5 = sld [smem:[#allocation0]]
  $region38: #{tpu_custom_call.1} parent=0
    _
  %s7 = ssub.s32 1, %s5
  %s8 = scalar_select 0, %s7, %s5
  $region1: #{tpu_custom_call.1} parent=0
    #allocation2 [shape = 'u8[32768]{0}', space=vmem, size = 0x8000, scoped, tag = 'input window, operand 0, single buffered']
    #allocation3 [shape = 's32[1]{0}', space=sflag, size = 0x4, scoped, tag = 'scoped memory for tpu_custom_call.1']
    #allocation4 [shape = 's32[1]{0}', space=sflag, size = 0x4, scoped, tag = 'scoped memory for tpu_custom_call.1']
    #allocation5 [shape = 'u8[32768]{0}', space=vmem, size = 0x8000, scoped, tag = 'input window, operand 1, single buffered']
    #allocation6 [shape = 's32[1]{0}', space=sflag, size = 0x4, scoped, tag = 'scoped memory for tpu_custom_call.1']
    #allocation7 [shape = 'u8[196608]{0}', space=vmem, size = 0x30000, scoped, tag = 'input window, operand 2, single buffered']
    #allocation8 [shape = 'u8[65536]{0}', space=vmem, size = 0x10000, scoped, tag = 'output window, operand 0, single buffered']
    %9 = vsyncpa [#allocation3], 0
    %10 = vsyncpa [#allocation6], 0
    %11 = vsyncpa [#allocation4], 0
    // Predicated region
    $region2: #{tpu_custom_call.1} parent=1 // pred_check
      _
    $region3: #{tpu_custom_call.1} parent=1 // pred_check_branch
      %13 = sbr.rel (0) target = $region5
    $region4: #{tpu_custom_call.1} parent=1 // pred_region
      %s15 = ssub.s32 1024, 1024
      %16 = vsyncadd [#allocation3], %s15
      %s17 = sshll.u32 [#allocation2], 4
      %s18 = int_to_ptr.vmem [resolvable:$true] %s17
      %23 = dma.hbm_to_vmem [thread:$0]  %s0, 1024, %s18, [#allocation3], 64, 64, 4
    $region5: #{tpu_custom_call.1} parent=1 // pred_fallthru
      _
    // Predicated region
    $region6: #{tpu_custom_call.1} parent=1 // pred_check
      _
    $region7: #{tpu_custom_call.1} parent=1 // pred_check_branch
      %25 = sbr.rel (0) target = $region9
    $region8: #{tpu_custom_call.1} parent=1 // pred_region
      %s27 = ssub.s32 1024, 1024
      %28 = vsyncadd [#allocation6], %s27
      %s29 = sshll.u32 [#allocation5], 4
      %s30 = int_to_ptr.vmem [resolvable:$true] %s29
      %35 = dma.hbm_to_vmem [thread:$0]  %s1, 1024, %s30, [#allocation6], 64, 64, 4
    $region9: #{tpu_custom_call.1} parent=1 // pred_fallthru
      _
    // Predicated region
    $region10: #{tpu_custom_call.1} parent=1 // pred_check
      _
    $region11: #{tpu_custom_call.1} parent=1 // pred_check_branch
      %37 = sbr.rel (0) target = $region13
    $region12: #{tpu_custom_call.1} parent=1 // pred_region
      %s39 = ssub.s32 6144, 6144
      %40 = vsyncadd [#allocation6], %s39
      %s41 = sshll.u32 [#allocation7], 4
      %s42 = int_to_ptr.vmem [resolvable:$true] %s41
      %47 = dma.hbm_to_vmem [thread:$0]  %s2, 6144, %s42, [#allocation6], 64, 64, 4
    $region13: #{tpu_custom_call.1} parent=1 // pred_fallthru
      _
    // Predicated region
    $region14: #{tpu_custom_call.1} parent=1 // pred_check
      _
    $region15: #{tpu_custom_call.1} parent=1 // pred_check_branch
      %49 = sbr.rel (0) target = $region17
    $region16: #{tpu_custom_call.1} parent=1 // pred_region
      _
    $region17: #{tpu_custom_call.1} parent=1 // pred_fallthru
      _
    // Predicated region
    $region18: #{tpu_custom_call.1} parent=1 // pred_check
      _
    $region19: #{tpu_custom_call.1} parent=1 // pred_check_branch
      %51 = sbr.rel (0) target = $region21
    $region20: #{tpu_custom_call.1} parent=1 // pred_region
      %52 = dma.done [#allocation3], 1024
    $region21: #{tpu_custom_call.1} parent=1 // pred_fallthru
      _
    // Predicated region
    $region22: #{tpu_custom_call.1} parent=1 // pred_check
      _
    $region23: #{tpu_custom_call.1} parent=1 // pred_check_branch
      %54 = sbr.rel (0) target = $region25
    $region24: #{tpu_custom_call.1} parent=1 // pred_region
      %55 = dma.done [#allocation6], 1024
    $region25: #{tpu_custom_call.1} parent=1 // pred_fallthru
      _
    // Predicated region
    $region26: #{tpu_custom_call.1} parent=1 // pred_check
      _
    $region27: #{tpu_custom_call.1} parent=1 // pred_check_branch
      %57 = sbr.rel (0) target = $region29
    $region28: #{tpu_custom_call.1} parent=1 // pred_region
      %58 = dma.done [#allocation6], 6144
    $region29: #{tpu_custom_call.1} parent=1 // pred_fallthru
      _
    %v60 = vld [vmem:[#allocation2] sm:$0xf]
    %v61 = vld [vmem:[#allocation2 + $0x4] sm:$0xf]
    %v62 = vld [vmem:[#allocation2 + $0x8] sm:$0xf]
    %v63 = vld [vmem:[#allocation2 + $0xc] sm:$0xf]
    %v64 = vld [vmem:[#allocation2 + $0x10] sm:$0xf]
    %v65 = vld [vmem:[#allocation2 + $0x14] sm:$0xf]
    %v66 = vld [vmem:[#allocation2 + $0x18] sm:$0xf]
    %v67 = vld [vmem:[#allocation2 + $0x1c] sm:$0xf]
    %v68 = vld [vmem:[#allocation2 + $0x20] sm:$0xf]
    %v69 = vld [vmem:[#allocation2 + $0x24] sm:$0xf]
    %v70 = vld [vmem:[#allocation2 + $0x28] sm:$0xf]
    %v71 = vld [vmem:[#allocation2 + $0x2c] sm:$0xf]
    %v72 = vld [vmem:[#allocation2 + $0x30] sm:$0xf]
    %v73 = vld [vmem:[#allocation2 + $0x34] sm:$0xf]
    %v74 = vld [vmem:[#allocation2 + $0x38] sm:$0xf]
    %v75 = vld [vmem:[#allocation2 + $0x3c] sm:$0xf]
    %v76 = vld [vmem:[#allocation5] sm:$0xf]
    %v77 = vld [vmem:[#allocation5 + $0x4] sm:$0xf]
    %v78 = vld [vmem:[#allocation5 + $0x8] sm:$0xf]
    %v79 = vld [vmem:[#allocation5 + $0xc] sm:$0xf]
    %v80 = vld [vmem:[#allocation5 + $0x10] sm:$0xf]
    %v81 = vld [vmem:[#allocation5 + $0x14] sm:$0xf]
    %v82 = vld [vmem:[#allocation5 + $0x18] sm:$0xf]
    %v83 = vld [vmem:[#allocation5 + $0x1c] sm:$0xf]
    %v84 = vld [vmem:[#allocation5 + $0x20] sm:$0xf]
    %v85 = vld [vmem:[#allocation5 + $0x24] sm:$0xf]
    %v86 = vld [vmem:[#allocation5 + $0x28] sm:$0xf]
    %v87 = vld [vmem:[#allocation5 + $0x2c] sm:$0xf]
    %v88 = vld [vmem:[#allocation5 + $0x30] sm:$0xf]
    %v89 = vld [vmem:[#allocation5 + $0x34] sm:$0xf]
    %v90 = vld [vmem:[#allocation5 + $0x38] sm:$0xf]
    %v91 = vld [vmem:[#allocation5 + $0x3c] sm:$0xf]
    %v108 = vunpack.c.l.b16 %v60
    %v109 = vunpack.c.l.b16 %v61
    %v110 = vunpack.c.l.b16 %v62
    %v111 = vunpack.c.l.b16 %v63
    %v112 = vunpack.c.l.b16 %v64
    %v113 = vunpack.c.l.b16 %v65
    %v114 = vunpack.c.l.b16 %v66
    %v115 = vunpack.c.l.b16 %v67
    %v116 = vunpack.c.l.b16 %v68
    %v117 = vunpack.c.l.b16 %v69
    %v118 = vunpack.c.l.b16 %v70
    %v119 = vunpack.c.l.b16 %v71
    %v120 = vunpack.c.l.b16 %v72
    %v121 = vunpack.c.l.b16 %v73
    %v122 = vunpack.c.l.b16 %v74
    %v123 = vunpack.c.l.b16 %v75
    %v124 = vpack.c.b16 %v109, %v108
    %v125 = vpack.c.b16 %v111, %v110
    %v126 = vpack.c.b16 %v113, %v112
    %v127 = vpack.c.b16 %v115, %v114
    %v128 = vpack.c.b16 %v117, %v116
    %v129 = vpack.c.b16 %v119, %v118
    %v130 = vpack.c.b16 %v121, %v120
    %v131 = vpack.c.b16 %v123, %v122
    %v156 = vunpack.c.l.b16 %v76
    %v157 = vunpack.c.l.b16 %v77
    %v158 = vunpack.c.l.b16 %v78
    %v159 = vunpack.c.l.b16 %v79
    %v160 = vunpack.c.l.b16 %v80
    %v161 = vunpack.c.l.b16 %v81
    %v162 = vunpack.c.l.b16 %v82
    %v163 = vunpack.c.l.b16 %v83
    %v164 = vunpack.c.l.b16 %v84
    %v165 = vunpack.c.l.b16 %v85
    %v166 = vunpack.c.l.b16 %v86
    %v167 = vunpack.c.l.b16 %v87
    %v168 = vunpack.c.l.b16 %v88
    %v169 = vunpack.c.l.b16 %v89
    %v170 = vunpack.c.l.b16 %v90
    %v171 = vunpack.c.l.b16 %v91
    %v172 = vpack.c.b16 %v157, %v156
    %v173 = vpack.c.b16 %v159, %v158
    %v174 = vpack.c.b16 %v161, %v160
    %v175 = vpack.c.b16 %v163, %v162
    %v176 = vpack.c.b16 %v165, %v164
    %v177 = vpack.c.b16 %v167, %v166
    %v178 = vpack.c.b16 %v169, %v168
    %v179 = vpack.c.b16 %v171, %v170
    %188 = vmatprep.subr.bf16.mxu0 0
    %189 = vmatpush1.bf16.msra.mxu0 %v172
    %190 = vmatprep.subr.bf16.mxu0 0
    %191 = vmatpush1.bf16.msra.mxu0 %v173
    %192 = vmatprep.subr.bf16.mxu0 0
    %193 = vmatpush1.bf16.msra.mxu0 %v174
    %194 = vmatprep.subr.bf16.mxu0 0
    %195 = vmatpush1.bf16.msra.mxu0 %v175
    %196 = vmatprep.subr.bf16.mxu0 0
    %197 = vmatpush1.bf16.msra.mxu0 %v176
    %198 = vmatprep.subr.bf16.mxu0 0
    %199 = vmatpush1.bf16.msra.mxu0 %v177
    %200 = vmatprep.subr.bf16.mxu0 0
    %201 = vmatpush1.bf16.msra.mxu0 %v178
    %202 = vmatprep.subr.bf16.mxu0 0
    %203 = vmatpush1.bf16.msra.mxu0 %v179
    %204 = vmatprep.subr.bf16.mxu0 0
    %205 = vmatpush1.bf16.msra.mxu0 0
    %206 = vmatprep.subr.bf16.mxu0 0
    %207 = vmatpush1.bf16.msra.mxu0 0
    %208 = vmatprep.subr.bf16.mxu0 0
    %209 = vmatpush1.bf16.msra.mxu0 0
    %210 = vmatprep.subr.bf16.mxu0 0
    %211 = vmatpush1.bf16.msra.mxu0 0
    %212 = vmatprep.subr.bf16.mxu0 0
    %213 = vmatpush1.bf16.msra.mxu0 0
    %214 = vmatprep.subr.bf16.mxu0 0
    %215 = vmatpush1.bf16.msra.mxu0 0
    %216 = vmatprep.subr.bf16.mxu0 0
    %217 = vmatpush1.bf16.msra.mxu0 0
    %218 = vmatprep.subr.bf16.mxu0 0
    %219 = vmatpush1.bf16.msra.mxu0 0
    %220 = vmatprep.mubr.bf16.mxu0 0
    %221 = vmatmul.mubr.bf16.gmra.mrb[0].mxu0 %v124
    %v222 = vpop.f32.mrb[0].mxu0
    %v223 = vadd.f32 0.0, %v222
    %v224 = vpop.f32.mrb[0].mxu0
    %v225 = vpop.f32.mrb[0].mxu0
    %v226 = vadd.f32 0.0, %v225
    %v227 = vpop.f32.mrb[0].mxu0
    %228 = vmatprep.mubr.bf16.mxu0 0
    %229 = vmatmul.mubr.bf16.gmra.mrb[0].mxu0 %v125
    %v230 = vpop.f32.mrb[0].mxu0
    %v231 = vadd.f32 0.0, %v230
    %v232 = vpop.f32.mrb[0].mxu0
    %v233 = vpop.f32.mrb[0].mxu0
    %v234 = vadd.f32 0.0, %v233
    %v235 = vpop.f32.mrb[0].mxu0
    %236 = vmatprep.mubr.bf16.mxu0 0
    %237 = vmatmul.mubr.bf16.gmra.mrb[0].mxu0 %v126
    %v238 = vpop.f32.mrb[0].mxu0
    %v239 = vadd.f32 0.0, %v238
    %v240 = vpop.f32.mrb[0].mxu0
    %v241 = vpop.f32.mrb[0].mxu0
    %v242 = vadd.f32 0.0, %v241
    %v243 = vpop.f32.mrb[0].mxu0
    %244 = vmatprep.mubr.bf16.mxu0 0
    %245 = vmatmul.mubr.bf16.gmra.mrb[0].mxu0 %v127
    %v246 = vpop.f32.mrb[0].mxu0
    %v247 = vadd.f32 0.0, %v246
    %v248 = vpop.f32.mrb[0].mxu0
    %v249 = vpop.f32.mrb[0].mxu0
    %v250 = vadd.f32 0.0, %v249
    %v251 = vpop.f32.mrb[0].mxu0
    %252 = vmatprep.mubr.bf16.mxu0 0
    %253 = vmatmul.mubr.bf16.gmra.mrb[0].mxu0 %v128
    %v254 = vpop.f32.mrb[0].mxu0
    %v255 = vadd.f32 0.0, %v254
    %v256 = vpop.f32.mrb[0].mxu0
    %v257 = vpop.f32.mrb[0].mxu0
    %v258 = vadd.f32 0.0, %v257
    %v259 = vpop.f32.mrb[0].mxu0
    %260 = vmatprep.mubr.bf16.mxu0 0
    %261 = vmatmul.mubr.bf16.gmra.mrb[0].mxu0 %v129
    %v262 = vpop.f32.mrb[0].mxu0
    %v263 = vadd.f32 0.0, %v262
    %v264 = vpop.f32.mrb[0].mxu0
    %v265 = vpop.f32.mrb[0].mxu0
    %v266 = vadd.f32 0.0, %v265
    %v267 = vpop.f32.mrb[0].mxu0
    %268 = vmatprep.mubr.bf16.mxu0 0
    %269 = vmatmul.mubr.bf16.gmra.mrb[0].mxu0 %v130
    %v270 = vpop.f32.mrb[0].mxu0
    %v271 = vadd.f32 0.0, %v270
    %v272 = vpop.f32.mrb[0].mxu0
    %v273 = vpop.f32.mrb[0].mxu0
    %v274 = vadd.f32 0.0, %v273
    %v275 = vpop.f32.mrb[0].mxu0
    %276 = vmatprep.mubr.bf16.mxu0 0
    %277 = vmatmul.mubr.bf16.gmra.mrb[0].mxu0 %v131
    %v278 = vpop.f32.mrb[0].mxu0
    %v279 = vadd.f32 0.0, %v278
    %v280 = vpop.f32.mrb[0].mxu0
    %v281 = vpop.f32.mrb[0].mxu0
    %v282 = vadd.f32 0.0, %v281
    %v283 = vpop.f32.mrb[0].mxu0
    %284 = vdwg.mxu0
    %v285 = vpack.c.bf16 %v226, %v223
    %v286 = vpack.c.bf16 %v234, %v231
    %v287 = vpack.c.bf16 %v242, %v239
    %v288 = vpack.c.bf16 %v250, %v247
    %v289 = vpack.c.bf16 %v258, %v255
    %v290 = vpack.c.bf16 %v266, %v263
    %v291 = vpack.c.bf16 %v274, %v271
    %v292 = vpack.c.bf16 %v282, %v279
    %v293 = vld [vmem:[#allocation7] sm:$0xf]
    %v294 = vld [vmem:[#allocation7 + $0x4] sm:$0xf]
    %v295 = vld [vmem:[#allocation7 + $0x8] sm:$0xf]
    %v296 = vld [vmem:[#allocation7 + $0xc] sm:$0xf]
    %v297 = vld [vmem:[#allocation7 + $0x10] sm:$0xf]
    %v298 = vld [vmem:[#allocation7 + $0x14] sm:$0xf]
    %v299 = vld [vmem:[#allocation7 + $0x18] sm:$0xf]
    %v300 = vld [vmem:[#allocation7 + $0x1c] sm:$0xf]
    %v301 = vld [vmem:[#allocation7 + $0x20] sm:$0xf]
    %v302 = vld [vmem:[#allocation7 + $0x24] sm:$0xf]
    %v303 = vld [vmem:[#allocation7 + $0x28] sm:$0xf]
    %v304 = vld [vmem:[#allocation7 + $0x2c] sm:$0xf]
    %v305 = vld [vmem:[#allocation7 + $0x30] sm:$0xf]
    %v306 = vld [vmem:[#allocation7 + $0x34] sm:$0xf]
    %v307 = vld [vmem:[#allocation7 + $0x38] sm:$0xf]
    %v308 = vld [vmem:[#allocation7 + $0x3c] sm:$0xf]
    %v309 = vld [vmem:[#allocation7 + $0x40] sm:$0xf]
    %v310 = vld [vmem:[#allocation7 + $0x44] sm:$0xf]
    %v311 = vld [vmem:[#allocation7 + $0x48] sm:$0xf]
    %v312 = vld [vmem:[#allocation7 + $0x4c] sm:$0xf]
    %v313 = vld [vmem:[#allocation7 + $0x50] sm:$0xf]
    %v314 = vld [vmem:[#allocation7 + $0x54] sm:$0xf]
    %v315 = vld [vmem:[#allocation7 + $0x58] sm:$0xf]
    %v316 = vld [vmem:[#allocation7 + $0x5c] sm:$0xf]
    %v317 = vld [vmem:[#allocation7 + $0x60] sm:$0xf]
    %v318 = vld [vmem:[#allocation7 + $0x64] sm:$0xf]
    %v319 = vld [vmem:[#allocation7 + $0x68] sm:$0xf]
    %v320 = vld [vmem:[#allocation7 + $0x6c] sm:$0xf]
    %v321 = vld [vmem:[#allocation7 + $0x70] sm:$0xf]
    %v322 = vld [vmem:[#allocation7 + $0x74] sm:$0xf]
    %v323 = vld [vmem:[#allocation7 + $0x78] sm:$0xf]
    %v324 = vld [vmem:[#allocation7 + $0x7c] sm:$0xf]
    %v341 = vunpack.c.l.b16 %v309
    %v342 = vunpack.c.l.b16 %v310
    %v343 = vunpack.c.l.b16 %v311
    %v344 = vunpack.c.l.b16 %v312
    %v345 = vunpack.c.l.b16 %v313
    %v346 = vunpack.c.l.b16 %v314
    %v347 = vunpack.c.l.b16 %v315
    %v348 = vunpack.c.l.b16 %v316
    %v349 = vunpack.c.l.b16 %v317
    %v350 = vunpack.c.l.b16 %v318
    %v351 = vunpack.c.l.b16 %v319
    %v352 = vunpack.c.l.b16 %v320
    %v353 = vunpack.c.l.b16 %v321
    %v354 = vunpack.c.l.b16 %v322
    %v355 = vunpack.c.l.b16 %v323
    %v356 = vunpack.c.l.b16 %v324
    %v357 = vpack.c.b16 %v342, %v341
    %v358 = vpack.c.b16 %v344, %v343
    %v359 = vpack.c.b16 %v346, %v345
    %v360 = vpack.c.b16 %v348, %v347
    %v361 = vpack.c.b16 %v350, %v349
    %v362 = vpack.c.b16 %v352, %v351
    %v363 = vpack.c.b16 %v354, %v353
    %v364 = vpack.c.b16 %v356, %v355
    %373 = vmatprep.subr.bf16.mxu0 0
    %374 = vmatpush1.bf16.msra.mxu0 %v357
    %375 = vmatprep.subr.bf16.mxu0 0
    %376 = vmatpush1.bf16.msra.mxu0 %v358
    %377 = vmatprep.subr.bf16.mxu0 0
    %378 = vmatpush1.bf16.msra.mxu0 %v359
    %379 = vmatprep.subr.bf16.mxu0 0
    %380 = vmatpush1.bf16.msra.mxu0 %v360
    %381 = vmatprep.subr.bf16.mxu0 0
    %382 = vmatpush1.bf16.msra.mxu0 %v361
    %383 = vmatprep.subr.bf16.mxu0 0
    %384 = vmatpush1.bf16.msra.mxu0 %v362
    %385 = vmatprep.subr.bf16.mxu0 0
    %386 = vmatpush1.bf16.msra.mxu0 %v363
    %387 = vmatprep.subr.bf16.mxu0 0
    %388 = vmatpush1.bf16.msra.mxu0 %v364
    %389 = vmatprep.subr.bf16.mxu0 0
    %390 = vmatpush1.bf16.msra.mxu0 0
    %391 = vmatprep.subr.bf16.mxu0 0
    %392 = vmatpush1.bf16.msra.mxu0 0
    %393 = vmatprep.subr.bf16.mxu0 0
    %394 = vmatpush1.bf16.msra.mxu0 0
    %395 = vmatprep.subr.bf16.mxu0 0
    %396 = vmatpush1.bf16.msra.mxu0 0
    %397 = vmatprep.subr.bf16.mxu0 0
    %398 = vmatpush1.bf16.msra.mxu0 0
    %399 = vmatprep.subr.bf16.mxu0 0
    %400 = vmatpush1.bf16.msra.mxu0 0
    %401 = vmatprep.subr.bf16.mxu0 0
    %402 = vmatpush1.bf16.msra.mxu0 0
    %403 = vmatprep.subr.bf16.mxu0 0
    %404 = vmatpush1.bf16.msra.mxu0 0
    %405 = vmatprep.mubr.bf16.mxu0 0
    %406 = vmatmul.mubr.bf16.gmra.mrb[0].mxu0 %v172
    %v407 = vpop.f32.mrb[0].mxu0
    %v408 = vadd.f32 0.0, %v407
    %v409 = vpop.f32.mrb[0].mxu0
    %v410 = vpop.f32.mrb[0].mxu0
    %v411 = vadd.f32 0.0, %v410
    %v412 = vpop.f32.mrb[0].mxu0
    %413 = vmatprep.mubr.bf16.mxu0 0
    %414 = vmatmul.mubr.bf16.gmra.mrb[0].mxu0 %v173
    %v415 = vpop.f32.mrb[0].mxu0
    %v416 = vadd.f32 0.0, %v415
    %v417 = vpop.f32.mrb[0].mxu0
    %v418 = vpop.f32.mrb[0].mxu0
    %v419 = vadd.f32 0.0, %v418
    %v420 = vpop.f32.mrb[0].mxu0
    %421 = vmatprep.mubr.bf16.mxu0 0
    %422 = vmatmul.mubr.bf16.gmra.mrb[0].mxu0 %v174
    %v423 = vpop.f32.mrb[0].mxu0
    %v424 = vadd.f32 0.0, %v423
    %v425 = vpop.f32.mrb[0].mxu0
    %v426 = vpop.f32.mrb[0].mxu0
    %v427 = vadd.f32 0.0, %v426
    %v428 = vpop.f32.mrb[0].mxu0
    %429 = vmatprep.mubr.bf16.mxu0 0
    %430 = vmatmul.mubr.bf16.gmra.mrb[0].mxu0 %v175
    %v431 = vpop.f32.mrb[0].mxu0
    %v432 = vadd.f32 0.0, %v431
    %v433 = vpop.f32.mrb[0].mxu0
    %v434 = vpop.f32.mrb[0].mxu0
    %v435 = vadd.f32 0.0, %v434
    %v436 = vpop.f32.mrb[0].mxu0
    %437 = vmatprep.mubr.bf16.mxu0 0
    %438 = vmatmul.mubr.bf16.gmra.mrb[0].mxu0 %v176
    %v439 = vpop.f32.mrb[0].mxu0
    %v440 = vadd.f32 0.0, %v439
    %v441 = vpop.f32.mrb[0].mxu0
    %v442 = vpop.f32.mrb[0].mxu0
    %v443 = vadd.f32 0.0, %v442
    %v444 = vpop.f32.mrb[0].mxu0
    %445 = vmatprep.mubr.bf16.mxu0 0
    %446 = vmatmul.mubr.bf16.gmra.mrb[0].mxu0 %v177
    %v447 = vpop.f32.mrb[0].mxu0
    %v448 = vadd.f32 0.0, %v447
    %v449 = vpop.f32.mrb[0].mxu0
    %v450 = vpop.f32.mrb[0].mxu0
    %v451 = vadd.f32 0.0, %v450
    %v452 = vpop.f32.mrb[0].mxu0
    %453 = vmatprep.mubr.bf16.mxu0 0
    %454 = vmatmul.mubr.bf16.gmra.mrb[0].mxu0 %v178
    %v455 = vpop.f32.mrb[0].mxu0
    %v456 = vadd.f32 0.0, %v455
    %v457 = vpop.f32.mrb[0].mxu0
    %v458 = vpop.f32.mrb[0].mxu0
    %v459 = vadd.f32 0.0, %v458
    %v460 = vpop.f32.mrb[0].mxu0
    %461 = vmatprep.mubr.bf16.mxu0 0
    %462 = vmatmul.mubr.bf16.gmra.mrb[0].mxu0 %v179
    %v463 = vpop.f32.mrb[0].mxu0
    %v464 = vadd.f32 0.0, %v463
    %v465 = vpop.f32.mrb[0].mxu0
    %v466 = vpop.f32.mrb[0].mxu0
    %v467 = vadd.f32 0.0, %v466
    %v468 = vpop.f32.mrb[0].mxu0
    %469 = vdwg.mxu0
    %v486 = vunpack.c.l.b16 %v293
    %v487 = vunpack.c.l.b16 %v294
    %v488 = vunpack.c.l.b16 %v295
    %v489 = vunpack.c.l.b16 %v296
    %v490 = vunpack.c.l.b16 %v297
    %v491 = vunpack.c.l.b16 %v298
    %v492 = vunpack.c.l.b16 %v299
    %v493 = vunpack.c.l.b16 %v300
    %v494 = vunpack.c.l.b16 %v301
    %v495 = vunpack.c.l.b16 %v302
    %v496 = vunpack.c.l.b16 %v303
    %v497 = vunpack.c.l.b16 %v304
    %v498 = vunpack.c.l.b16 %v305
    %v499 = vunpack.c.l.b16 %v306
    %v500 = vunpack.c.l.b16 %v307
    %v501 = vunpack.c.l.b16 %v308
    %v502 = vpack.c.b16 %v487, %v486
    %v503 = vpack.c.b16 %v489, %v488
    %v504 = vpack.c.b16 %v491, %v490
    %v505 = vpack.c.b16 %v493, %v492
    %v506 = vpack.c.b16 %v495, %v494
    %v507 = vpack.c.b16 %v497, %v496
    %v508 = vpack.c.b16 %v499, %v498
    %v509 = vpack.c.b16 %v501, %v500
    %518 = vmatprep.subr.bf16.mxu0 0
    %519 = vmatpush1.bf16.msra.mxu0 %v502
    %520 = vmatprep.subr.bf16.mxu0 0
    %521 = vmatpush1.bf16.msra.mxu0 %v503
    %522 = vmatprep.subr.bf16.mxu0 0
    %523 = vmatpush1.bf16.msra.mxu0 %v504
    %524 = vmatprep.subr.bf16.mxu0 0
    %525 = vmatpush1.bf16.msra.mxu0 %v505
    %526 = vmatprep.subr.bf16.mxu0 0
    %527 = vmatpush1.bf16.msra.mxu0 %v506
    %528 = vmatprep.subr.bf16.mxu0 0
    %529 = vmatpush1.bf16.msra.mxu0 %v507
    %530 = vmatprep.subr.bf16.mxu0 0
    %531 = vmatpush1.bf16.msra.mxu0 %v508
    %532 = vmatprep.subr.bf16.mxu0 0
    %533 = vmatpush1.bf16.msra.mxu0 %v509
    %534 = vmatprep.subr.bf16.mxu0 0
    %535 = vmatpush1.bf16.msra.mxu0 0
    %536 = vmatprep.subr.bf16.mxu0 0
    %537 = vmatpush1.bf16.msra.mxu0 0
    %538 = vmatprep.subr.bf16.mxu0 0
    %539 = vmatpush1.bf16.msra.mxu0 0
    %540 = vmatprep.subr.bf16.mxu0 0
    %541 = vmatpush1.bf16.msra.mxu0 0
    %542 = vmatprep.subr.bf16.mxu0 0
    %543 = vmatpush1.bf16.msra.mxu0 0
    %544 = vmatprep.subr.bf16.mxu0 0
    %545 = vmatpush1.bf16.msra.mxu0 0
    %546 = vmatprep.subr.bf16.mxu0 0
    %547 = vmatpush1.bf16.msra.mxu0 0
    %548 = vmatprep.subr.bf16.mxu0 0
    %549 = vmatpush1.bf16.msra.mxu0 0
    %550 = vmatprep.mubr.bf16.mxu0 0
    %551 = vmatmul.mubr.bf16.gmra.mrb[0].mxu0 %v285
    %v552 = vpop.f32.mrb[0].mxu0
    %v553 = vadd.f32 %v408, %v552
    %v554 = vpop.f32.mrb[0].mxu0
    %v555 = vpop.f32.mrb[0].mxu0
    %v556 = vadd.f32 %v411, %v555
    %v557 = vpop.f32.mrb[0].mxu0
    %558 = vmatprep.mubr.bf16.mxu0 0
    %559 = vmatmul.mubr.bf16.gmra.mrb[0].mxu0 %v286
    %v560 = vpop.f32.mrb[0].mxu0
    %v561 = vadd.f32 %v416, %v560
    %v562 = vpop.f32.mrb[0].mxu0
    %v563 = vpop.f32.mrb[0].mxu0
    %v564 = vadd.f32 %v419, %v563
    %v565 = vpop.f32.mrb[0].mxu0
    %566 = vmatprep.mubr.bf16.mxu0 0
    %567 = vmatmul.mubr.bf16.gmra.mrb[0].mxu0 %v287
    %v568 = vpop.f32.mrb[0].mxu0
    %v569 = vadd.f32 %v424, %v568
    %v570 = vpop.f32.mrb[0].mxu0
    %v571 = vpop.f32.mrb[0].mxu0
    %v572 = vadd.f32 %v427, %v571
    %v573 = vpop.f32.mrb[0].mxu0
    %574 = vmatprep.mubr.bf16.mxu0 0
    %575 = vmatmul.mubr.bf16.gmra.mrb[0].mxu0 %v288
    %v576 = vpop.f32.mrb[0].mxu0
    %v577 = vadd.f32 %v432, %v576
    %v578 = vpop.f32.mrb[0].mxu0
    %v579 = vpop.f32.mrb[0].mxu0
    %v580 = vadd.f32 %v435, %v579
    %v581 = vpop.f32.mrb[0].mxu0
    %582 = vmatprep.mubr.bf16.mxu0 0
    %583 = vmatmul.mubr.bf16.gmra.mrb[0].mxu0 %v289
    %v584 = vpop.f32.mrb[0].mxu0
    %v585 = vadd.f32 %v440, %v584
    %v586 = vpop.f32.mrb[0].mxu0
    %v587 = vpop.f32.mrb[0].mxu0
    %v588 = vadd.f32 %v443, %v587
    %v589 = vpop.f32.mrb[0].mxu0
    %590 = vmatprep.mubr.bf16.mxu0 0
    %591 = vmatmul.mubr.bf16.gmra.mrb[0].mxu0 %v290
    %v592 = vpop.f32.mrb[0].mxu0
    %v593 = vadd.f32 %v448, %v592
    %v594 = vpop.f32.mrb[0].mxu0
    %v595 = vpop.f32.mrb[0].mxu0
    %v596 = vadd.f32 %v451, %v595
    %v597 = vpop.f32.mrb[0].mxu0
    %598 = vmatprep.mubr.bf16.mxu0 0
    %599 = vmatmul.mubr.bf16.gmra.mrb[0].mxu0 %v291
    %v600 = vpop.f32.mrb[0].mxu0
    %v601 = vadd.f32 %v456, %v600
    %v602 = vpop.f32.mrb[0].mxu0
    %v603 = vpop.f32.mrb[0].mxu0
    %v604 = vadd.f32 %v459, %v603
    %v605 = vpop.f32.mrb[0].mxu0
    %606 = vmatprep.mubr.bf16.mxu0 0
    %607 = vmatmul.mubr.bf16.gmra.mrb[0].mxu0 %v292
    %v608 = vpop.f32.mrb[0].mxu0
    %v609 = vadd.f32 %v464, %v608
    %v610 = vpop.f32.mrb[0].mxu0
    %v611 = vpop.f32.mrb[0].mxu0
    %v612 = vadd.f32 %v467, %v611
    %v613 = vpop.f32.mrb[0].mxu0
    %614 = vdwg.mxu0
    %v615 = vld [vmem:[%s3] sm:$0x1]
    %v617 = vlaneseq
    %v618 = vshrl.u32 %v617, 7
    %v619 = vsub.s32 0, %v618
    %v620 = vrot.slane %v615, %v619
    %v622 = vadd.f32 %v553, %v620
    %v623 = vadd.f32 %v556, %v620
    %v624 = vadd.f32 %v561, %v620
    %v625 = vadd.f32 %v564, %v620
    %v626 = vadd.f32 %v569, %v620
    %v627 = vadd.f32 %v572, %v620
    %v628 = vadd.f32 %v577, %v620
    %v629 = vadd.f32 %v580, %v620
    %v630 = vadd.f32 %v585, %v620
    %v631 = vadd.f32 %v588, %v620
    %v632 = vadd.f32 %v593, %v620
    %v633 = vadd.f32 %v596, %v620
    %v634 = vadd.f32 %v601, %v620
    %v635 = vadd.f32 %v604, %v620
    %v636 = vadd.f32 %v609, %v620
    %v637 = vadd.f32 %v612, %v620
    %v638 = vmax.f32 %v622, 0.0
    %v639 = vmax.f32 %v623, 0.0
    %v640 = vmax.f32 %v624, 0.0
    %v641 = vmax.f32 %v625, 0.0
    %v642 = vmax.f32 %v626, 0.0
    %v643 = vmax.f32 %v627, 0.0
    %v644 = vmax.f32 %v628, 0.0
    %v645 = vmax.f32 %v629, 0.0
    %v646 = vmax.f32 %v630, 0.0
    %v647 = vmax.f32 %v631, 0.0
    %v648 = vmax.f32 %v632, 0.0
    %v649 = vmax.f32 %v633, 0.0
    %v650 = vmax.f32 %v634, 0.0
    %v651 = vmax.f32 %v635, 0.0
    %v652 = vmax.f32 %v636, 0.0
    %v653 = vmax.f32 %v637, 0.0
    %v654 = vpack.c.bf16 %v639, %v638
    %v655 = vpack.c.bf16 %v641, %v640
    %v656 = vpack.c.bf16 %v643, %v642
    %v657 = vpack.c.bf16 %v645, %v644
    %v658 = vpack.c.bf16 %v647, %v646
    %v659 = vpack.c.bf16 %v649, %v648
    %v660 = vpack.c.bf16 %v651, %v650
    %v661 = vpack.c.bf16 %v653, %v652
    %662 = vmatprep.subr.bf16.mxu0 0
    %663 = vmatpush1.bf16.msra.mxu0 %v654
    %664 = vmatprep.subr.bf16.mxu0 0
    %665 = vmatpush1.bf16.msra.mxu0 %v655
    %666 = vmatprep.subr.bf16.mxu0 0
    %667 = vmatpush1.bf16.msra.mxu0 %v656
    %668 = vmatprep.subr.bf16.mxu0 0
    %669 = vmatpush1.bf16.msra.mxu0 %v657
    %670 = vmatprep.subr.bf16.mxu0 0
    %671 = vmatpush1.bf16.msra.mxu0 %v658
    %672 = vmatprep.subr.bf16.mxu0 0
    %673 = vmatpush1.bf16.msra.mxu0 %v659
    %674 = vmatprep.subr.bf16.mxu0 0
    %675 = vmatpush1.bf16.msra.mxu0 %v660
    %676 = vmatprep.subr.bf16.mxu0 0
    %677 = vmatpush1.bf16.msra.mxu0 %v661
    %678 = vmatprep.subr.bf16.mxu0 0
    %679 = vmatpush1.bf16.msra.mxu0 0
    %680 = vmatprep.subr.bf16.mxu0 0
    %681 = vmatpush1.bf16.msra.mxu0 0
    %682 = vmatprep.subr.bf16.mxu0 0
    %683 = vmatpush1.bf16.msra.mxu0 0
    %684 = vmatprep.subr.bf16.mxu0 0
    %685 = vmatpush1.bf16.msra.mxu0 0
    %686 = vmatprep.subr.bf16.mxu0 0
    %687 = vmatpush1.bf16.msra.mxu0 0
    %688 = vmatprep.subr.bf16.mxu0 0
    %689 = vmatpush1.bf16.msra.mxu0 0
    %690 = vmatprep.subr.bf16.mxu0 0
    %691 = vmatpush1.bf16.msra.mxu0 0
    %692 = vmatprep.subr.bf16.mxu0 0
    %693 = vmatpush1.bf16.msra.mxu0 0
    %694 = vmatprep.mubr.bf16.mxu0 0
    %695 = vmatmul.mubr.bf16.gmra.mrb[0].mxu0 %v124
    %v696 = vpop.f32.mrb[0].mxu0
    %v697 = vadd.f32 0.0, %v696
    %v698 = vpop.f32.mrb[0].mxu0
    %v699 = vpop.f32.mrb[0].mxu0
    %v700 = vadd.f32 0.0, %v699
    %v701 = vpop.f32.mrb[0].mxu0
    %702 = vmatprep.mubr.bf16.mxu0 0
    %703 = vmatmul.mubr.bf16.gmra.mrb[0].mxu0 %v125
    %v704 = vpop.f32.mrb[0].mxu0
    %v705 = vadd.f32 0.0, %v704
    %v706 = vpop.f32.mrb[0].mxu0
    %v707 = vpop.f32.mrb[0].mxu0
    %v708 = vadd.f32 0.0, %v707
    %v709 = vpop.f32.mrb[0].mxu0
    %710 = vmatprep.mubr.bf16.mxu0 0
    %711 = vmatmul.mubr.bf16.gmra.mrb[0].mxu0 %v126
    %v712 = vpop.f32.mrb[0].mxu0
    %v713 = vadd.f32 0.0, %v712
    %v714 = vpop.f32.mrb[0].mxu0
    %v715 = vpop.f32.mrb[0].mxu0
    %v716 = vadd.f32 0.0, %v715
    %v717 = vpop.f32.mrb[0].mxu0
    %718 = vmatprep.mubr.bf16.mxu0 0
    %719 = vmatmul.mubr.bf16.gmra.mrb[0].mxu0 %v127
    %v720 = vpop.f32.mrb[0].mxu0
    %v721 = vadd.f32 0.0, %v720
    %v722 = vpop.f32.mrb[0].mxu0
    %v723 = vpop.f32.mrb[0].mxu0
    %v724 = vadd.f32 0.0, %v723
    %v725 = vpop.f32.mrb[0].mxu0
    %726 = vmatprep.mubr.bf16.mxu0 0
    %727 = vmatmul.mubr.bf16.gmra.mrb[0].mxu0 %v128
    %v728 = vpop.f32.mrb[0].mxu0
    %v729 = vadd.f32 0.0, %v728
    %v730 = vpop.f32.mrb[0].mxu0
    %v731 = vpop.f32.mrb[0].mxu0
    %v732 = vadd.f32 0.0, %v731
    %v733 = vpop.f32.mrb[0].mxu0
    %734 = vmatprep.mubr.bf16.mxu0 0
    %735 = vmatmul.mubr.bf16.gmra.mrb[0].mxu0 %v129
    %v736 = vpop.f32.mrb[0].mxu0
    %v737 = vadd.f32 0.0, %v736
    %v738 = vpop.f32.mrb[0].mxu0
    %v739 = vpop.f32.mrb[0].mxu0
    %v740 = vadd.f32 0.0, %v739
    %v741 = vpop.f32.mrb[0].mxu0
    %742 = vmatprep.mubr.bf16.mxu0 0
    %743 = vmatmul.mubr.bf16.gmra.mrb[0].mxu0 %v130
    %v744 = vpop.f32.mrb[0].mxu0
    %v745 = vadd.f32 0.0, %v744
    %v746 = vpop.f32.mrb[0].mxu0
    %v747 = vpop.f32.mrb[0].mxu0
    %v748 = vadd.f32 0.0, %v747
    %v749 = vpop.f32.mrb[0].mxu0
    %750 = vmatprep.mubr.bf16.mxu0 0
    %751 = vmatmul.mubr.bf16.gmra.mrb[0].mxu0 %v131
    %v752 = vpop.f32.mrb[0].mxu0
    %v753 = vadd.f32 0.0, %v752
    %v754 = vpop.f32.mrb[0].mxu0
    %v755 = vpop.f32.mrb[0].mxu0
    %v756 = vadd.f32 0.0, %v755
    %v757 = vpop.f32.mrb[0].mxu0
    %758 = vdwg.mxu0
    %v759 = vpack.c.bf16 %v700, %v697
    %v760 = vpack.c.bf16 %v708, %v705
    %v761 = vpack.c.bf16 %v716, %v713
    %v762 = vpack.c.bf16 %v724, %v721
    %v763 = vpack.c.bf16 %v732, %v729
    %v764 = vpack.c.bf16 %v740, %v737
    %v765 = vpack.c.bf16 %v748, %v745
    %v766 = vpack.c.bf16 %v756, %v753
    %s767 = scalar_lea.vmem [#allocation7], 128
    %v768 = vld [vmem:[%s767] sm:$0xf]
    %v769 = vld [vmem:[%s767 + $0x4] sm:$0xf]
    %v770 = vld [vmem:[%s767 + $0x8] sm:$0xf]
    %v771 = vld [vmem:[%s767 + $0xc] sm:$0xf]
    %v772 = vld [vmem:[%s767 + $0x10] sm:$0xf]
    %v773 = vld [vmem:[%s767 + $0x14] sm:$0xf]
    %v774 = vld [vmem:[%s767 + $0x18] sm:$0xf]
    %v775 = vld [vmem:[%s767 + $0x1c] sm:$0xf]
    %v776 = vld [vmem:[%s767 + $0x20] sm:$0xf]
    %v777 = vld [vmem:[%s767 + $0x24] sm:$0xf]
    %v778 = vld [vmem:[%s767 + $0x28] sm:$0xf]
    %v779 = vld [vmem:[%s767 + $0x2c] sm:$0xf]
    %v780 = vld [vmem:[%s767 + $0x30] sm:$0xf]
    %v781 = vld [vmem:[%s767 + $0x34] sm:$0xf]
    %v782 = vld [vmem:[%s767 + $0x38] sm:$0xf]
    %v783 = vld [vmem:[%s767 + $0x3c] sm:$0xf]
    %v784 = vld [vmem:[%s767 + $0x40] sm:$0xf]
    %v785 = vld [vmem:[%s767 + $0x44] sm:$0xf]
    %v786 = vld [vmem:[%s767 + $0x48] sm:$0xf]
    %v787 = vld [vmem:[%s767 + $0x4c] sm:$0xf]
    %v788 = vld [vmem:[%s767 + $0x50] sm:$0xf]
    %v789 = vld [vmem:[%s767 + $0x54] sm:$0xf]
    %v790 = vld [vmem:[%s767 + $0x58] sm:$0xf]
    %v791 = vld [vmem:[%s767 + $0x5c] sm:$0xf]
    %v792 = vld [vmem:[%s767 + $0x60] sm:$0xf]
    %v793 = vld [vmem:[%s767 + $0x64] sm:$0xf]
    %v794 = vld [vmem:[%s767 + $0x68] sm:$0xf]
    %v795 = vld [vmem:[%s767 + $0x6c] sm:$0xf]
    %v796 = vld [vmem:[%s767 + $0x70] sm:$0xf]
    %v797 = vld [vmem:[%s767 + $0x74] sm:$0xf]
    %v798 = vld [vmem:[%s767 + $0x78] sm:$0xf]
    %v799 = vld [vmem:[%s767 + $0x7c] sm:$0xf]
    %v816 = vunpack.c.l.b16 %v784
    %v817 = vunpack.c.l.b16 %v785
    %v818 = vunpack.c.l.b16 %v786
    %v819 = vunpack.c.l.b16 %v787
    %v820 = vunpack.c.l.b16 %v788
    %v821 = vunpack.c.l.b16 %v789
    %v822 = vunpack.c.l.b16 %v790
    %v823 = vunpack.c.l.b16 %v791
    %v824 = vunpack.c.l.b16 %v792
    %v825 = vunpack.c.l.b16 %v793
    %v826 = vunpack.c.l.b16 %v794
    %v827 = vunpack.c.l.b16 %v795
    %v828 = vunpack.c.l.b16 %v796
    %v829 = vunpack.c.l.b16 %v797
    %v830 = vunpack.c.l.b16 %v798
    %v831 = vunpack.c.l.b16 %v799
    %v832 = vpack.c.b16 %v817, %v816
    %v833 = vpack.c.b16 %v819, %v818
    %v834 = vpack.c.b16 %v821, %v820
    %v835 = vpack.c.b16 %v823, %v822
    %v836 = vpack.c.b16 %v825, %v824
    %v837 = vpack.c.b16 %v827, %v826
    %v838 = vpack.c.b16 %v829, %v828
    %v839 = vpack.c.b16 %v831, %v830
    %848 = vmatprep.subr.bf16.mxu0 0
    %849 = vmatpush1.bf16.msra.mxu0 %v832
    %850 = vmatprep.subr.bf16.mxu0 0
    %851 = vmatpush1.bf16.msra.mxu0 %v833
    %852 = vmatprep.subr.bf16.mxu0 0
    %853 = vmatpush1.bf16.msra.mxu0 %v834
    %854 = vmatprep.subr.bf16.mxu0 0
    %855 = vmatpush1.bf16.msra.mxu0 %v835
    %856 = vmatprep.subr.bf16.mxu0 0
    %857 = vmatpush1.bf16.msra.mxu0 %v836
    %858 = vmatprep.subr.bf16.mxu0 0
    %859 = vmatpush1.bf16.msra.mxu0 %v837
    %860 = vmatprep.subr.bf16.mxu0 0
    %861 = vmatpush1.bf16.msra.mxu0 %v838
    %862 = vmatprep.subr.bf16.mxu0 0
    %863 = vmatpush1.bf16.msra.mxu0 %v839
    %864 = vmatprep.subr.bf16.mxu0 0
    %865 = vmatpush1.bf16.msra.mxu0 0
    %866 = vmatprep.subr.bf16.mxu0 0
    %867 = vmatpush1.bf16.msra.mxu0 0
    %868 = vmatprep.subr.bf16.mxu0 0
    %869 = vmatpush1.bf16.msra.mxu0 0
    %870 = vmatprep.subr.bf16.mxu0 0
    %871 = vmatpush1.bf16.msra.mxu0 0
    %872 = vmatprep.subr.bf16.mxu0 0
    %873 = vmatpush1.bf16.msra.mxu0 0
    %874 = vmatprep.subr.bf16.mxu0 0
    %875 = vmatpush1.bf16.msra.mxu0 0
    %876 = vmatprep.subr.bf16.mxu0 0
    %877 = vmatpush1.bf16.msra.mxu0 0
    %878 = vmatprep.subr.bf16.mxu0 0
    %879 = vmatpush1.bf16.msra.mxu0 0
    %880 = vmatprep.mubr.bf16.mxu0 0
    %881 = vmatmul.mubr.bf16.gmra.mrb[0].mxu0 %v654
    %v882 = vpop.f32.mrb[0].mxu0
    %v883 = vadd.f32 0.0, %v882
    %v884 = vpop.f32.mrb[0].mxu0
    %v885 = vpop.f32.mrb[0].mxu0
    %v886 = vadd.f32 0.0, %v885
    %v887 = vpop.f32.mrb[0].mxu0
    %888 = vmatprep.mubr.bf16.mxu0 0
    %889 = vmatmul.mubr.bf16.gmra.mrb[0].mxu0 %v655
    %v890 = vpop.f32.mrb[0].mxu0
    %v891 = vadd.f32 0.0, %v890
    %v892 = vpop.f32.mrb[0].mxu0
    %v893 = vpop.f32.mrb[0].mxu0
    %v894 = vadd.f32 0.0, %v893
    %v895 = vpop.f32.mrb[0].mxu0
    %896 = vmatprep.mubr.bf16.mxu0 0
    %897 = vmatmul.mubr.bf16.gmra.mrb[0].mxu0 %v656
    %v898 = vpop.f32.mrb[0].mxu0
    %v899 = vadd.f32 0.0, %v898
    %v900 = vpop.f32.mrb[0].mxu0
    %v901 = vpop.f32.mrb[0].mxu0
    %v902 = vadd.f32 0.0, %v901
    %v903 = vpop.f32.mrb[0].mxu0
    %904 = vmatprep.mubr.bf16.mxu0 0
    %905 = vmatmul.mubr.bf16.gmra.mrb[0].mxu0 %v657
    %v906 = vpop.f32.mrb[0].mxu0
    %v907 = vadd.f32 0.0, %v906
    %v908 = vpop.f32.mrb[0].mxu0
    %v909 = vpop.f32.mrb[0].mxu0
    %v910 = vadd.f32 0.0, %v909
    %v911 = vpop.f32.mrb[0].mxu0
    %912 = vmatprep.mubr.bf16.mxu0 0
    %913 = vmatmul.mubr.bf16.gmra.mrb[0].mxu0 %v658
    %v914 = vpop.f32.mrb[0].mxu0
    %v915 = vadd.f32 0.0, %v914
    %v916 = vpop.f32.mrb[0].mxu0
    %v917 = vpop.f32.mrb[0].mxu0
    %v918 = vadd.f32 0.0, %v917
    %v919 = vpop.f32.mrb[0].mxu0
    %920 = vmatprep.mubr.bf16.mxu0 0
    %921 = vmatmul.mubr.bf16.gmra.mrb[0].mxu0 %v659
    %v922 = vpop.f32.mrb[0].mxu0
    %v923 = vadd.f32 0.0, %v922
    %v924 = vpop.f32.mrb[0].mxu0
    %v925 = vpop.f32.mrb[0].mxu0
    %v926 = vadd.f32 0.0, %v925
    %v927 = vpop.f32.mrb[0].mxu0
    %928 = vmatprep.mubr.bf16.mxu0 0
    %929 = vmatmul.mubr.bf16.gmra.mrb[0].mxu0 %v660
    %v930 = vpop.f32.mrb[0].mxu0
    %v931 = vadd.f32 0.0, %v930
    %v932 = vpop.f32.mrb[0].mxu0
    %v933 = vpop.f32.mrb[0].mxu0
    %v934 = vadd.f32 0.0, %v933
    %v935 = vpop.f32.mrb[0].mxu0
    %936 = vmatprep.mubr.bf16.mxu0 0
    %937 = vmatmul.mubr.bf16.gmra.mrb[0].mxu0 %v661
    %v938 = vpop.f32.mrb[0].mxu0
    %v939 = vadd.f32 0.0, %v938
    %v940 = vpop.f32.mrb[0].mxu0
    %v941 = vpop.f32.mrb[0].mxu0
    %v942 = vadd.f32 0.0, %v941
    %v943 = vpop.f32.mrb[0].mxu0
    %944 = vdwg.mxu0
    %v961 = vunpack.c.l.b16 %v768
    %v962 = vunpack.c.l.b16 %v769
    %v963 = vunpack.c.l.b16 %v770
    %v964 = vunpack.c.l.b16 %v771
    %v965 = vunpack.c.l.b16 %v772
    %v966 = vunpack.c.l.b16 %v773
    %v967 = vunpack.c.l.b16 %v774
    %v968 = vunpack.c.l.b16 %v775
    %v969 = vunpack.c.l.b16 %v776
    %v970 = vunpack.c.l.b16 %v777
    %v971 = vunpack.c.l.b16 %v778
    %v972 = vunpack.c.l.b16 %v779
    %v973 = vunpack.c.l.b16 %v780
    %v974 = vunpack.c.l.b16 %v781
    %v975 = vunpack.c.l.b16 %v782
    %v976 = vunpack.c.l.b16 %v783
    %v977 = vpack.c.b16 %v962, %v961
    %v978 = vpack.c.b16 %v964, %v963
    %v979 = vpack.c.b16 %v966, %v965
    %v980 = vpack.c.b16 %v968, %v967
    %v981 = vpack.c.b16 %v970, %v969
    %v982 = vpack.c.b16 %v972, %v971
    %v983 = vpack.c.b16 %v974, %v973
    %v984 = vpack.c.b16 %v976, %v975
    %993 = vmatprep.subr.bf16.mxu0 0
    %994 = vmatpush1.bf16.msra.mxu0 %v977
    %995 = vmatprep.subr.bf16.mxu0 0
    %996 = vmatpush1.bf16.msra.mxu0 %v978
    %997 = vmatprep.subr.bf16.mxu0 0
    %998 = vmatpush1.bf16.msra.mxu0 %v979
    %999 = vmatprep.subr.bf16.mxu0 0
    %1000 = vmatpush1.bf16.msra.mxu0 %v980
    %1001 = vmatprep.subr.bf16.mxu0 0
    %1002 = vmatpush1.bf16.msra.mxu0 %v981
    %1003 = vmatprep.subr.bf16.mxu0 0
    %1004 = vmatpush1.bf16.msra.mxu0 %v982
    %1005 = vmatprep.subr.bf16.mxu0 0
    %1006 = vmatpush1.bf16.msra.mxu0 %v983
    %1007 = vmatprep.subr.bf16.mxu0 0
    %1008 = vmatpush1.bf16.msra.mxu0 %v984
    %1009 = vmatprep.subr.bf16.mxu0 0
    %1010 = vmatpush1.bf16.msra.mxu0 0
    %1011 = vmatprep.subr.bf16.mxu0 0
    %1012 = vmatpush1.bf16.msra.mxu0 0
    %1013 = vmatprep.subr.bf16.mxu0 0
    %1014 = vmatpush1.bf16.msra.mxu0 0
    %1015 = vmatprep.subr.bf16.mxu0 0
    %1016 = vmatpush1.bf16.msra.mxu0 0
    %1017 = vmatprep.subr.bf16.mxu0 0
    %1018 = vmatpush1.bf16.msra.mxu0 0
    %1019 = vmatprep.subr.bf16.mxu0 0
    %1020 = vmatpush1.bf16.msra.mxu0 0
    %1021 = vmatprep.subr.bf16.mxu0 0
    %1022 = vmatpush1.bf16.msra.mxu0 0
    %1023 = vmatprep.subr.bf16.mxu0 0
    %1024 = vmatpush1.bf16.msra.mxu0 0
    %1025 = vmatprep.mubr.bf16.mxu0 0
    %1026 = vmatmul.mubr.bf16.gmra.mrb[0].mxu0 %v759
    %v1027 = vpop.f32.mrb[0].mxu0
    %v1028 = vadd.f32 %v883, %v1027
    %v1029 = vpop.f32.mrb[0].mxu0
    %v1030 = vpop.f32.mrb[0].mxu0
    %v1031 = vadd.f32 %v886, %v1030
    %v1032 = vpop.f32.mrb[0].mxu0
    %1033 = vmatprep.mubr.bf16.mxu0 0
    %1034 = vmatmul.mubr.bf16.gmra.mrb[0].mxu0 %v760
    %v1035 = vpop.f32.mrb[0].mxu0
    %v1036 = vadd.f32 %v891, %v1035
    %v1037 = vpop.f32.mrb[0].mxu0
    %v1038 = vpop.f32.mrb[0].mxu0
    %v1039 = vadd.f32 %v894, %v1038
    %v1040 = vpop.f32.mrb[0].mxu0
    %1041 = vmatprep.mubr.bf16.mxu0 0
    %1042 = vmatmul.mubr.bf16.gmra.mrb[0].mxu0 %v761
    %v1043 = vpop.f32.mrb[0].mxu0
    %v1044 = vadd.f32 %v899, %v1043
    %v1045 = vpop.f32.mrb[0].mxu0
    %v1046 = vpop.f32.mrb[0].mxu0
    %v1047 = vadd.f32 %v902, %v1046
    %v1048 = vpop.f32.mrb[0].mxu0
    %1049 = vmatprep.mubr.bf16.mxu0 0
    %1050 = vmatmul.mubr.bf16.gmra.mrb[0].mxu0 %v762
    %v1051 = vpop.f32.mrb[0].mxu0
    %v1052 = vadd.f32 %v907, %v1051
    %v1053 = vpop.f32.mrb[0].mxu0
    %v1054 = vpop.f32.mrb[0].mxu0
    %v1055 = vadd.f32 %v910, %v1054
    %v1056 = vpop.f32.mrb[0].mxu0
    %1057 = vmatprep.mubr.bf16.mxu0 0
    %1058 = vmatmul.mubr.bf16.gmra.mrb[0].mxu0 %v763
    %v1059 = vpop.f32.mrb[0].mxu0
    %v1060 = vadd.f32 %v915, %v1059
    %v1061 = vpop.f32.mrb[0].mxu0
    %v1062 = vpop.f32.mrb[0].mxu0
    %v1063 = vadd.f32 %v918, %v1062
    %v1064 = vpop.f32.mrb[0].mxu0
    %1065 = vmatprep.mubr.bf16.mxu0 0
    %1066 = vmatmul.mubr.bf16.gmra.mrb[0].mxu0 %v764
    %v1067 = vpop.f32.mrb[0].mxu0
    %v1068 = vadd.f32 %v923, %v1067
    %v1069 = vpop.f32.mrb[0].mxu0
    %v1070 = vpop.f32.mrb[0].mxu0
    %v1071 = vadd.f32 %v926, %v1070
    %v1072 = vpop.f32.mrb[0].mxu0
    %1073 = vmatprep.mubr.bf16.mxu0 0
    %1074 = vmatmul.mubr.bf16.gmra.mrb[0].mxu0 %v765
    %v1075 = vpop.f32.mrb[0].mxu0
    %v1076 = vadd.f32 %v931, %v1075
    %v1077 = vpop.f32.mrb[0].mxu0
    %v1078 = vpop.f32.mrb[0].mxu0
    %v1079 = vadd.f32 %v934, %v1078
    %v1080 = vpop.f32.mrb[0].mxu0
    %1081 = vmatprep.mubr.bf16.mxu0 0
    %1082 = vmatmul.mubr.bf16.gmra.mrb[0].mxu0 %v766
    %v1083 = vpop.f32.mrb[0].mxu0
    %v1084 = vadd.f32 %v939, %v1083
    %v1085 = vpop.f32.mrb[0].mxu0
    %v1086 = vpop.f32.mrb[0].mxu0
    %v1087 = vadd.f32 %v942, %v1086
    %v1088 = vpop.f32.mrb[0].mxu0
    %1089 = vdwg.mxu0
    %s1090 = scalar_lea.vmem %s3, 1
    %v1091 = vld [vmem:[%s1090] sm:$0x1]
    %v1093 = vlaneseq
    %v1094 = vshrl.u32 %v1093, 7
    %v1095 = vsub.s32 0, %v1094
    %v1096 = vrot.slane %v1091, %v1095
    %v1098 = vadd.f32 %v1028, %v1096
    %v1099 = vadd.f32 %v1031, %v1096
    %v1100 = vadd.f32 %v1036, %v1096
    %v1101 = vadd.f32 %v1039, %v1096
    %v1102 = vadd.f32 %v1044, %v1096
    %v1103 = vadd.f32 %v1047, %v1096
    %v1104 = vadd.f32 %v1052, %v1096
    %v1105 = vadd.f32 %v1055, %v1096
    %v1106 = vadd.f32 %v1060, %v1096
    %v1107 = vadd.f32 %v1063, %v1096
    %v1108 = vadd.f32 %v1068, %v1096
    %v1109 = vadd.f32 %v1071, %v1096
    %v1110 = vadd.f32 %v1076, %v1096
    %v1111 = vadd.f32 %v1079, %v1096
    %v1112 = vadd.f32 %v1084, %v1096
    %v1113 = vadd.f32 %v1087, %v1096
    %v1114 = vmax.f32 %v1098, 0.0
    %v1115 = vmax.f32 %v1099, 0.0
    %v1116 = vmax.f32 %v1100, 0.0
    %v1117 = vmax.f32 %v1101, 0.0
    %v1118 = vmax.f32 %v1102, 0.0
    %v1119 = vmax.f32 %v1103, 0.0
    %v1120 = vmax.f32 %v1104, 0.0
    %v1121 = vmax.f32 %v1105, 0.0
    %v1122 = vmax.f32 %v1106, 0.0
    %v1123 = vmax.f32 %v1107, 0.0
    %v1124 = vmax.f32 %v1108, 0.0
    %v1125 = vmax.f32 %v1109, 0.0
    %v1126 = vmax.f32 %v1110, 0.0
    %v1127 = vmax.f32 %v1111, 0.0
    %v1128 = vmax.f32 %v1112, 0.0
    %v1129 = vmax.f32 %v1113, 0.0
    %v1130 = vpack.c.bf16 %v1115, %v1114
    %v1131 = vpack.c.bf16 %v1117, %v1116
    %v1132 = vpack.c.bf16 %v1119, %v1118
    %v1133 = vpack.c.bf16 %v1121, %v1120
    %v1134 = vpack.c.bf16 %v1123, %v1122
    %v1135 = vpack.c.bf16 %v1125, %v1124
    %v1136 = vpack.c.bf16 %v1127, %v1126
    %v1137 = vpack.c.bf16 %v1129, %v1128
    %1138 = vmatprep.subr.bf16.mxu0 0
    %1139 = vmatpush1.bf16.msra.mxu0 %v1130
    %1140 = vmatprep.subr.bf16.mxu0 0
    %1141 = vmatpush1.bf16.msra.mxu0 %v1131
    %1142 = vmatprep.subr.bf16.mxu0 0
    %1143 = vmatpush1.bf16.msra.mxu0 %v1132
    %1144 = vmatprep.subr.bf16.mxu0 0
    %1145 = vmatpush1.bf16.msra.mxu0 %v1133
    %1146 = vmatprep.subr.bf16.mxu0 0
    %1147 = vmatpush1.bf16.msra.mxu0 %v1134
    %1148 = vmatprep.subr.bf16.mxu0 0
    %1149 = vmatpush1.bf16.msra.mxu0 %v1135
    %1150 = vmatprep.subr.bf16.mxu0 0
    %1151 = vmatpush1.bf16.msra.mxu0 %v1136
    %1152 = vmatprep.subr.bf16.mxu0 0
    %1153 = vmatpush1.bf16.msra.mxu0 %v1137
    %1154 = vmatprep.subr.bf16.mxu0 0
    %1155 = vmatpush1.bf16.msra.mxu0 0
    %1156 = vmatprep.subr.bf16.mxu0 0
    %1157 = vmatpush1.bf16.msra.mxu0 0
    %1158 = vmatprep.subr.bf16.mxu0 0
    %1159 = vmatpush1.bf16.msra.mxu0 0
    %1160 = vmatprep.subr.bf16.mxu0 0
    %1161 = vmatpush1.bf16.msra.mxu0 0
    %1162 = vmatprep.subr.bf16.mxu0 0
    %1163 = vmatpush1.bf16.msra.mxu0 0
    %1164 = vmatprep.subr.bf16.mxu0 0
    %1165 = vmatpush1.bf16.msra.mxu0 0
    %1166 = vmatprep.subr.bf16.mxu0 0
    %1167 = vmatpush1.bf16.msra.mxu0 0
    %1168 = vmatprep.subr.bf16.mxu0 0
    %1169 = vmatpush1.bf16.msra.mxu0 0
    %1170 = vmatprep.mubr.bf16.mxu0 0
    %1171 = vmatmul.mubr.bf16.gmra.mrb[0].mxu0 %v124
    %v1172 = vpop.f32.mrb[0].mxu0
    %v1173 = vadd.f32 0.0, %v1172
    %v1174 = vpop.f32.mrb[0].mxu0
    %v1175 = vpop.f32.mrb[0].mxu0
    %v1176 = vadd.f32 0.0, %v1175
    %v1177 = vpop.f32.mrb[0].mxu0
    %1178 = vmatprep.mubr.bf16.mxu0 0
    %1179 = vmatmul.mubr.bf16.gmra.mrb[0].mxu0 %v125
    %v1180 = vpop.f32.mrb[0].mxu0
    %v1181 = vadd.f32 0.0, %v1180
    %v1182 = vpop.f32.mrb[0].mxu0
    %v1183 = vpop.f32.mrb[0].mxu0
    %v1184 = vadd.f32 0.0, %v1183
    %v1185 = vpop.f32.mrb[0].mxu0
    %1186 = vmatprep.mubr.bf16.mxu0 0
    %1187 = vmatmul.mubr.bf16.gmra.mrb[0].mxu0 %v126
    %v1188 = vpop.f32.mrb[0].mxu0
    %v1189 = vadd.f32 0.0, %v1188
    %v1190 = vpop.f32.mrb[0].mxu0
    %v1191 = vpop.f32.mrb[0].mxu0
    %v1192 = vadd.f32 0.0, %v1191
    %v1193 = vpop.f32.mrb[0].mxu0
    %1194 = vmatprep.mubr.bf16.mxu0 0
    %1195 = vmatmul.mubr.bf16.gmra.mrb[0].mxu0 %v127
    %v1196 = vpop.f32.mrb[0].mxu0
    %v1197 = vadd.f32 0.0, %v1196
    %v1198 = vpop.f32.mrb[0].mxu0
    %v1199 = vpop.f32.mrb[0].mxu0
    %v1200 = vadd.f32 0.0, %v1199
    %v1201 = vpop.f32.mrb[0].mxu0
    %1202 = vmatprep.mubr.bf16.mxu0 0
    %1203 = vmatmul.mubr.bf16.gmra.mrb[0].mxu0 %v128
    %v1204 = vpop.f32.mrb[0].mxu0
    %v1205 = vadd.f32 0.0, %v1204
    %v1206 = vpop.f32.mrb[0].mxu0
    %v1207 = vpop.f32.mrb[0].mxu0
    %v1208 = vadd.f32 0.0, %v1207
    %v1209 = vpop.f32.mrb[0].mxu0
    %1210 = vmatprep.mubr.bf16.mxu0 0
    %1211 = vmatmul.mubr.bf16.gmra.mrb[0].mxu0 %v129
    %v1212 = vpop.f32.mrb[0].mxu0
    %v1213 = vadd.f32 0.0, %v1212
    %v1214 = vpop.f32.mrb[0].mxu0
    %v1215 = vpop.f32.mrb[0].mxu0
    %v1216 = vadd.f32 0.0, %v1215
    %v1217 = vpop.f32.mrb[0].mxu0
    %1218 = vmatprep.mubr.bf16.mxu0 0
    %1219 = vmatmul.mubr.bf16.gmra.mrb[0].mxu0 %v130
    %v1220 = vpop.f32.mrb[0].mxu0
    %v1221 = vadd.f32 0.0, %v1220
    %v1222 = vpop.f32.mrb[0].mxu0
    %v1223 = vpop.f32.mrb[0].mxu0
    %v1224 = vadd.f32 0.0, %v1223
    %v1225 = vpop.f32.mrb[0].mxu0
    %1226 = vmatprep.mubr.bf16.mxu0 0
    %1227 = vmatmul.mubr.bf16.gmra.mrb[0].mxu0 %v131
    %v1228 = vpop.f32.mrb[0].mxu0
    %v1229 = vadd.f32 0.0, %v1228
    %v1230 = vpop.f32.mrb[0].mxu0
    %v1231 = vpop.f32.mrb[0].mxu0
    %v1232 = vadd.f32 0.0, %v1231
    %v1233 = vpop.f32.mrb[0].mxu0
    %1234 = vdwg.mxu0
    %v1235 = vpack.c.bf16 %v1176, %v1173
    %v1236 = vpack.c.bf16 %v1184, %v1181
    %v1237 = vpack.c.bf16 %v1192, %v1189
    %v1238 = vpack.c.bf16 %v1200, %v1197
    %v1239 = vpack.c.bf16 %v1208, %v1205
    %v1240 = vpack.c.bf16 %v1216, %v1213
    %v1241 = vpack.c.bf16 %v1224, %v1221
    %v1242 = vpack.c.bf16 %v1232, %v1229
    %s1243 = scalar_lea.vmem [#allocation7], 256
    %v1244 = vld [vmem:[%s1243] sm:$0xf]
    %v1245 = vld [vmem:[%s1243 + $0x4] sm:$0xf]
    %v1246 = vld [vmem:[%s1243 + $0x8] sm:$0xf]
    %v1247 = vld [vmem:[%s1243 + $0xc] sm:$0xf]
    %v1248 = vld [vmem:[%s1243 + $0x10] sm:$0xf]
    %v1249 = vld [vmem:[%s1243 + $0x14] sm:$0xf]
    %v1250 = vld [vmem:[%s1243 + $0x18] sm:$0xf]
    %v1251 = vld [vmem:[%s1243 + $0x1c] sm:$0xf]
    %v1252 = vld [vmem:[%s1243 + $0x20] sm:$0xf]
    %v1253 = vld [vmem:[%s1243 + $0x24] sm:$0xf]
    %v1254 = vld [vmem:[%s1243 + $0x28] sm:$0xf]
    %v1255 = vld [vmem:[%s1243 + $0x2c] sm:$0xf]
    %v1256 = vld [vmem:[%s1243 + $0x30] sm:$0xf]
    %v1257 = vld [vmem:[%s1243 + $0x34] sm:$0xf]
    %v1258 = vld [vmem:[%s1243 + $0x38] sm:$0xf]
    %v1259 = vld [vmem:[%s1243 + $0x3c] sm:$0xf]
    %v1260 = vld [vmem:[%s1243 + $0x40] sm:$0xf]
    %v1261 = vld [vmem:[%s1243 + $0x44] sm:$0xf]
    %v1262 = vld [vmem:[%s1243 + $0x48] sm:$0xf]
    %v1263 = vld [vmem:[%s1243 + $0x4c] sm:$0xf]
    %v1264 = vld [vmem:[%s1243 + $0x50] sm:$0xf]
    %v1265 = vld [vmem:[%s1243 + $0x54] sm:$0xf]
    %v1266 = vld [vmem:[%s1243 + $0x58] sm:$0xf]
    %v1267 = vld [vmem:[%s1243 + $0x5c] sm:$0xf]
    %v1268 = vld [vmem:[%s1243 + $0x60] sm:$0xf]
    %v1269 = vld [vmem:[%s1243 + $0x64] sm:$0xf]
    %v1270 = vld [vmem:[%s1243 + $0x68] sm:$0xf]
    %v1271 = vld [vmem:[%s1243 + $0x6c] sm:$0xf]
    %v1272 = vld [vmem:[%s1243 + $0x70] sm:$0xf]
    %v1273 = vld [vmem:[%s1243 + $0x74] sm:$0xf]
    %v1274 = vld [vmem:[%s1243 + $0x78] sm:$0xf]
    %v1275 = vld [vmem:[%s1243 + $0x7c] sm:$0xf]
    %v1292 = vunpack.c.l.b16 %v1260
    %v1293 = vunpack.c.l.b16 %v1261
    %v1294 = vunpack.c.l.b16 %v1262
    %v1295 = vunpack.c.l.b16 %v1263
    %v1296 = vunpack.c.l.b16 %v1264
    %v1297 = vunpack.c.l.b16 %v1265
    %v1298 = vunpack.c.l.b16 %v1266
    %v1299 = vunpack.c.l.b16 %v1267
    %v1300 = vunpack.c.l.b16 %v1268
    %v1301 = vunpack.c.l.b16 %v1269
    %v1302 = vunpack.c.l.b16 %v1270
    %v1303 = vunpack.c.l.b16 %v1271
    %v1304 = vunpack.c.l.b16 %v1272
    %v1305 = vunpack.c.l.b16 %v1273
    %v1306 = vunpack.c.l.b16 %v1274
    %v1307 = vunpack.c.l.b16 %v1275
    %v1308 = vpack.c.b16 %v1293, %v1292
    %v1309 = vpack.c.b16 %v1295, %v1294
    %v1310 = vpack.c.b16 %v1297, %v1296
    %v1311 = vpack.c.b16 %v1299, %v1298
    %v1312 = vpack.c.b16 %v1301, %v1300
    %v1313 = vpack.c.b16 %v1303, %v1302
    %v1314 = vpack.c.b16 %v1305, %v1304
    %v1315 = vpack.c.b16 %v1307, %v1306
    %1324 = vmatprep.subr.bf16.mxu0 0
    %1325 = vmatpush1.bf16.msra.mxu0 %v1308
    %1326 = vmatprep.subr.bf16.mxu0 0
    %1327 = vmatpush1.bf16.msra.mxu0 %v1309
    %1328 = vmatprep.subr.bf16.mxu0 0
    %1329 = vmatpush1.bf16.msra.mxu0 %v1310
    %1330 = vmatprep.subr.bf16.mxu0 0
    %1331 = vmatpush1.bf16.msra.mxu0 %v1311
    %1332 = vmatprep.subr.bf16.mxu0 0
    %1333 = vmatpush1.bf16.msra.mxu0 %v1312
    %1334 = vmatprep.subr.bf16.mxu0 0
    %1335 = vmatpush1.bf16.msra.mxu0 %v1313
    %1336 = vmatprep.subr.bf16.mxu0 0
    %1337 = vmatpush1.bf16.msra.mxu0 %v1314
    %1338 = vmatprep.subr.bf16.mxu0 0
    %1339 = vmatpush1.bf16.msra.mxu0 %v1315
    %1340 = vmatprep.subr.bf16.mxu0 0
    %1341 = vmatpush1.bf16.msra.mxu0 0
    %1342 = vmatprep.subr.bf16.mxu0 0
    %1343 = vmatpush1.bf16.msra.mxu0 0
    %1344 = vmatprep.subr.bf16.mxu0 0
    %1345 = vmatpush1.bf16.msra.mxu0 0
    %1346 = vmatprep.subr.bf16.mxu0 0
    %1347 = vmatpush1.bf16.msra.mxu0 0
    %1348 = vmatprep.subr.bf16.mxu0 0
    %1349 = vmatpush1.bf16.msra.mxu0 0
    %1350 = vmatprep.subr.bf16.mxu0 0
    %1351 = vmatpush1.bf16.msra.mxu0 0
    %1352 = vmatprep.subr.bf16.mxu0 0
    %1353 = vmatpush1.bf16.msra.mxu0 0
    %1354 = vmatprep.subr.bf16.mxu0 0
    %1355 = vmatpush1.bf16.msra.mxu0 0
    %1356 = vmatprep.mubr.bf16.mxu0 0
    %1357 = vmatmul.mubr.bf16.gmra.mrb[0].mxu0 %v1130
    %v1358 = vpop.f32.mrb[0].mxu0
    %v1359 = vadd.f32 0.0, %v1358
    %v1360 = vpop.f32.mrb[0].mxu0
    %v1361 = vpop.f32.mrb[0].mxu0
    %v1362 = vadd.f32 0.0, %v1361
    %v1363 = vpop.f32.mrb[0].mxu0
    %1364 = vmatprep.mubr.bf16.mxu0 0
    %1365 = vmatmul.mubr.bf16.gmra.mrb[0].mxu0 %v1131
    %v1366 = vpop.f32.mrb[0].mxu0
    %v1367 = vadd.f32 0.0, %v1366
    %v1368 = vpop.f32.mrb[0].mxu0
    %v1369 = vpop.f32.mrb[0].mxu0
    %v1370 = vadd.f32 0.0, %v1369
    %v1371 = vpop.f32.mrb[0].mxu0
    %1372 = vmatprep.mubr.bf16.mxu0 0
    %1373 = vmatmul.mubr.bf16.gmra.mrb[0].mxu0 %v1132
    %v1374 = vpop.f32.mrb[0].mxu0
    %v1375 = vadd.f32 0.0, %v1374
    %v1376 = vpop.f32.mrb[0].mxu0
    %v1377 = vpop.f32.mrb[0].mxu0
    %v1378 = vadd.f32 0.0, %v1377
    %v1379 = vpop.f32.mrb[0].mxu0
    %1380 = vmatprep.mubr.bf16.mxu0 0
    %1381 = vmatmul.mubr.bf16.gmra.mrb[0].mxu0 %v1133
    %v1382 = vpop.f32.mrb[0].mxu0
    %v1383 = vadd.f32 0.0, %v1382
    %v1384 = vpop.f32.mrb[0].mxu0
    %v1385 = vpop.f32.mrb[0].mxu0
    %v1386 = vadd.f32 0.0, %v1385
    %v1387 = vpop.f32.mrb[0].mxu0
    %1388 = vmatprep.mubr.bf16.mxu0 0
    %1389 = vmatmul.mubr.bf16.gmra.mrb[0].mxu0 %v1134
    %v1390 = vpop.f32.mrb[0].mxu0
    %v1391 = vadd.f32 0.0, %v1390
    %v1392 = vpop.f32.mrb[0].mxu0
    %v1393 = vpop.f32.mrb[0].mxu0
    %v1394 = vadd.f32 0.0, %v1393
    %v1395 = vpop.f32.mrb[0].mxu0
    %1396 = vmatprep.mubr.bf16.mxu0 0
    %1397 = vmatmul.mubr.bf16.gmra.mrb[0].mxu0 %v1135
    %v1398 = vpop.f32.mrb[0].mxu0
    %v1399 = vadd.f32 0.0, %v1398
    %v1400 = vpop.f32.mrb[0].mxu0
    %v1401 = vpop.f32.mrb[0].mxu0
    %v1402 = vadd.f32 0.0, %v1401
    %v1403 = vpop.f32.mrb[0].mxu0
    %1404 = vmatprep.mubr.bf16.mxu0 0
    %1405 = vmatmul.mubr.bf16.gmra.mrb[0].mxu0 %v1136
    %v1406 = vpop.f32.mrb[0].mxu0
    %v1407 = vadd.f32 0.0, %v1406
    %v1408 = vpop.f32.mrb[0].mxu0
    %v1409 = vpop.f32.mrb[0].mxu0
    %v1410 = vadd.f32 0.0, %v1409
    %v1411 = vpop.f32.mrb[0].mxu0
    %1412 = vmatprep.mubr.bf16.mxu0 0
    %1413 = vmatmul.mubr.bf16.gmra.mrb[0].mxu0 %v1137
    %v1414 = vpop.f32.mrb[0].mxu0
    %v1415 = vadd.f32 0.0, %v1414
    %v1416 = vpop.f32.mrb[0].mxu0
    %v1417 = vpop.f32.mrb[0].mxu0
    %v1418 = vadd.f32 0.0, %v1417
    %v1419 = vpop.f32.mrb[0].mxu0
    %1420 = vdwg.mxu0
    %v1437 = vunpack.c.l.b16 %v1244
    %v1438 = vunpack.c.l.b16 %v1245
    %v1439 = vunpack.c.l.b16 %v1246
    %v1440 = vunpack.c.l.b16 %v1247
    %v1441 = vunpack.c.l.b16 %v1248
    %v1442 = vunpack.c.l.b16 %v1249
    %v1443 = vunpack.c.l.b16 %v1250
    %v1444 = vunpack.c.l.b16 %v1251
    %v1445 = vunpack.c.l.b16 %v1252
    %v1446 = vunpack.c.l.b16 %v1253
    %v1447 = vunpack.c.l.b16 %v1254
    %v1448 = vunpack.c.l.b16 %v1255
    %v1449 = vunpack.c.l.b16 %v1256
    %v1450 = vunpack.c.l.b16 %v1257
    %v1451 = vunpack.c.l.b16 %v1258
    %v1452 = vunpack.c.l.b16 %v1259
    %v1453 = vpack.c.b16 %v1438, %v1437
    %v1454 = vpack.c.b16 %v1440, %v1439
    %v1455 = vpack.c.b16 %v1442, %v1441
    %v1456 = vpack.c.b16 %v1444, %v1443
    %v1457 = vpack.c.b16 %v1446, %v1445
    %v1458 = vpack.c.b16 %v1448, %v1447
    %v1459 = vpack.c.b16 %v1450, %v1449
    %v1460 = vpack.c.b16 %v1452, %v1451
    %1469 = vmatprep.subr.bf16.mxu0 0
    %1470 = vmatpush1.bf16.msra.mxu0 %v1453
    %1471 = vmatprep.subr.bf16.mxu0 0
    %1472 = vmatpush1.bf16.msra.mxu0 %v1454
    %1473 = vmatprep.subr.bf16.mxu0 0
    %1474 = vmatpush1.bf16.msra.mxu0 %v1455
    %1475 = vmatprep.subr.bf16.mxu0 0
    %1476 = vmatpush1.bf16.msra.mxu0 %v1456
    %1477 = vmatprep.subr.bf16.mxu0 0
    %1478 = vmatpush1.bf16.msra.mxu0 %v1457
    %1479 = vmatprep.subr.bf16.mxu0 0
    %1480 = vmatpush1.bf16.msra.mxu0 %v1458
    %1481 = vmatprep.subr.bf16.mxu0 0
    %1482 = vmatpush1.bf16.msra.mxu0 %v1459
    %1483 = vmatprep.subr.bf16.mxu0 0
    %1484 = vmatpush1.bf16.msra.mxu0 %v1460
    %1485 = vmatprep.subr.bf16.mxu0 0
    %1486 = vmatpush1.bf16.msra.mxu0 0
    %1487 = vmatprep.subr.bf16.mxu0 0
    %1488 = vmatpush1.bf16.msra.mxu0 0
    %1489 = vmatprep.subr.bf16.mxu0 0
    %1490 = vmatpush1.bf16.msra.mxu0 0
    %1491 = vmatprep.subr.bf16.mxu0 0
    %1492 = vmatpush1.bf16.msra.mxu0 0
    %1493 = vmatprep.subr.bf16.mxu0 0
    %1494 = vmatpush1.bf16.msra.mxu0 0
    %1495 = vmatprep.subr.bf16.mxu0 0
    %1496 = vmatpush1.bf16.msra.mxu0 0
    %1497 = vmatprep.subr.bf16.mxu0 0
    %1498 = vmatpush1.bf16.msra.mxu0 0
    %1499 = vmatprep.subr.bf16.mxu0 0
    %1500 = vmatpush1.bf16.msra.mxu0 0
    %1501 = vmatprep.mubr.bf16.mxu0 0
    %1502 = vmatmul.mubr.bf16.gmra.mrb[0].mxu0 %v1235
    %v1503 = vpop.f32.mrb[0].mxu0
    %v1504 = vadd.f32 %v1359, %v1503
    %v1505 = vpop.f32.mrb[0].mxu0
    %v1506 = vpop.f32.mrb[0].mxu0
    %v1507 = vadd.f32 %v1362, %v1506
    %v1508 = vpop.f32.mrb[0].mxu0
    %1509 = vmatprep.mubr.bf16.mxu0 0
    %1510 = vmatmul.mubr.bf16.gmra.mrb[0].mxu0 %v1236
    %v1511 = vpop.f32.mrb[0].mxu0
    %v1512 = vadd.f32 %v1367, %v1511
    %v1513 = vpop.f32.mrb[0].mxu0
    %v1514 = vpop.f32.mrb[0].mxu0
    %v1515 = vadd.f32 %v1370, %v1514
    %v1516 = vpop.f32.mrb[0].mxu0
    %1517 = vmatprep.mubr.bf16.mxu0 0
    %1518 = vmatmul.mubr.bf16.gmra.mrb[0].mxu0 %v1237
    %v1519 = vpop.f32.mrb[0].mxu0
    %v1520 = vadd.f32 %v1375, %v1519
    %v1521 = vpop.f32.mrb[0].mxu0
    %v1522 = vpop.f32.mrb[0].mxu0
    %v1523 = vadd.f32 %v1378, %v1522
    %v1524 = vpop.f32.mrb[0].mxu0
    %1525 = vmatprep.mubr.bf16.mxu0 0
    %1526 = vmatmul.mubr.bf16.gmra.mrb[0].mxu0 %v1238
    %v1527 = vpop.f32.mrb[0].mxu0
    %v1528 = vadd.f32 %v1383, %v1527
    %v1529 = vpop.f32.mrb[0].mxu0
    %v1530 = vpop.f32.mrb[0].mxu0
    %v1531 = vadd.f32 %v1386, %v1530
    %v1532 = vpop.f32.mrb[0].mxu0
    %1533 = vmatprep.mubr.bf16.mxu0 0
    %1534 = vmatmul.mubr.bf16.gmra.mrb[0].mxu0 %v1239
    %v1535 = vpop.f32.mrb[0].mxu0
    %v1536 = vadd.f32 %v1391, %v1535
    %v1537 = vpop.f32.mrb[0].mxu0
    %v1538 = vpop.f32.mrb[0].mxu0
    %v1539 = vadd.f32 %v1394, %v1538
    %v1540 = vpop.f32.mrb[0].mxu0
    %1541 = vmatprep.mubr.bf16.mxu0 0
    %1542 = vmatmul.mubr.bf16.gmra.mrb[0].mxu0 %v1240
    %v1543 = vpop.f32.mrb[0].mxu0
    %v1544 = vadd.f32 %v1399, %v1543
    %v1545 = vpop.f32.mrb[0].mxu0
    %v1546 = vpop.f32.mrb[0].mxu0
    %v1547 = vadd.f32 %v1402, %v1546
    %v1548 = vpop.f32.mrb[0].mxu0
    %1549 = vmatprep.mubr.bf16.mxu0 0
    %1550 = vmatmul.mubr.bf16.gmra.mrb[0].mxu0 %v1241
    %v1551 = vpop.f32.mrb[0].mxu0
    %v1552 = vadd.f32 %v1407, %v1551
    %v1553 = vpop.f32.mrb[0].mxu0
    %v1554 = vpop.f32.mrb[0].mxu0
    %v1555 = vadd.f32 %v1410, %v1554
    %v1556 = vpop.f32.mrb[0].mxu0
    %1557 = vmatprep.mubr.bf16.mxu0 0
    %1558 = vmatmul.mubr.bf16.gmra.mrb[0].mxu0 %v1242
    %v1559 = vpop.f32.mrb[0].mxu0
    %v1560 = vadd.f32 %v1415, %v1559
    %v1561 = vpop.f32.mrb[0].mxu0
    %v1562 = vpop.f32.mrb[0].mxu0
    %v1563 = vadd.f32 %v1418, %v1562
    %v1564 = vpop.f32.mrb[0].mxu0
    %1565 = vdwg.mxu0
    %s1566 = scalar_lea.vmem %s3, 2
    %v1567 = vld [vmem:[%s1566] sm:$0x1]
    %v1569 = vlaneseq
    %v1570 = vshrl.u32 %v1569, 7
    %v1571 = vsub.s32 0, %v1570
    %v1572 = vrot.slane %v1567, %v1571
    %v1574 = vadd.f32 %v1504, %v1572
    %v1575 = vadd.f32 %v1507, %v1572
    %v1576 = vadd.f32 %v1512, %v1572
    %v1577 = vadd.f32 %v1515, %v1572
    %v1578 = vadd.f32 %v1520, %v1572
    %v1579 = vadd.f32 %v1523, %v1572
    %v1580 = vadd.f32 %v1528, %v1572
    %v1581 = vadd.f32 %v1531, %v1572
    %v1582 = vadd.f32 %v1536, %v1572
    %v1583 = vadd.f32 %v1539, %v1572
    %v1584 = vadd.f32 %v1544, %v1572
    %v1585 = vadd.f32 %v1547, %v1572
    %v1586 = vadd.f32 %v1552, %v1572
    %v1587 = vadd.f32 %v1555, %v1572
    %v1588 = vadd.f32 %v1560, %v1572
    %v1589 = vadd.f32 %v1563, %v1572
    %1590 = vst [vmem:[#allocation8] sm:$0xff] %v1574
    %1591 = vst [vmem:[#allocation8 + $0x8] sm:$0xff] %v1575
    %1592 = vst [vmem:[#allocation8 + $0x10] sm:$0xff] %v1576
    %1593 = vst [vmem:[#allocation8 + $0x18] sm:$0xff] %v1577
    %1594 = vst [vmem:[#allocation8 + $0x20] sm:$0xff] %v1578
    %1595 = vst [vmem:[#allocation8 + $0x28] sm:$0xff] %v1579
    %1596 = vst [vmem:[#allocation8 + $0x30] sm:$0xff] %v1580
    %1597 = vst [vmem:[#allocation8 + $0x38] sm:$0xff] %v1581
    %1598 = vst [vmem:[#allocation8 + $0x40] sm:$0xff] %v1582
    %1599 = vst [vmem:[#allocation8 + $0x48] sm:$0xff] %v1583
    %1600 = vst [vmem:[#allocation8 + $0x50] sm:$0xff] %v1584
    %1601 = vst [vmem:[#allocation8 + $0x58] sm:$0xff] %v1585
    %1602 = vst [vmem:[#allocation8 + $0x60] sm:$0xff] %v1586
    %1603 = vst [vmem:[#allocation8 + $0x68] sm:$0xff] %v1587
    %1604 = vst [vmem:[#allocation8 + $0x70] sm:$0xff] %v1588
    %1605 = vst [vmem:[#allocation8 + $0x78] sm:$0xff] %v1589
    // Predicated region
    $region30: #{tpu_custom_call.1} parent=1 // pred_check
      _
    $region31: #{tpu_custom_call.1} parent=1 // pred_check_branch
      %1607 = sbr.rel (0) target = $region33
    $region32: #{tpu_custom_call.1} parent=1 // pred_region
      %s1609 = ssub.s32 2048, 2048
      %1610 = vsyncadd [#allocation4], %s1609
      %s1611 = sshll.u32 [#allocation8], 4
      %s1612 = int_to_ptr.vmem [resolvable:$true] %s1611
      %1617 = dma.vmem_to_hbm [thread:$0]  %s1612, 2048, %s4, [#allocation4], 128, 128, 8
    $region33: #{tpu_custom_call.1} parent=1 // pred_fallthru
      _
    // Predicated region
    $region34: #{tpu_custom_call.1} parent=1 // pred_check
      _
    $region35: #{tpu_custom_call.1} parent=1 // pred_check_branch
      %1619 = sbr.rel (0) target = $region37
    $region36: #{tpu_custom_call.1} parent=1 // pred_region
      %1620 = dma.done [#allocation4], 2048
    $region37: #{tpu_custom_call.1} parent=1 // pred_fallthru
      _
    %1621 = vsyncpa [#allocation3], 1
    %1622 = vsyncpa [#allocation6], 1
    %1623 = vsyncpa [#allocation4], 1

</llo_original>
